<compile_context>
chip_gen: v7x
topology: tpu7x:2x2x1
jax: 0.10.0
libtpu: 0.0.40
codegen_flags: <defaults>
</compile_context>

<pallas_src>
import functools
import math

import jax
import jax.numpy as jnp
from jax.experimental import pallas as pl
from jax.experimental.pallas import tpu as pltpu

INV_SQRT2 = 1.0 / math.sqrt(2.0)


def _round_up(x, m):
    return ((x + m - 1) // m) * m


def _activation(h, act):
    if act == "gelu":          # exact erf GeLU == torch.nn.functional.gelu default
        return 0.5 * h * (1.0 + jax.lax.erf(h * INV_SQRT2))
    if act == "gelu_tanh":     # tanh approximation (EUP path, different numerics)
        return jax.nn.gelu(h, approximate=True)
    if act == "relu":
        return jnp.maximum(h, 0.0)
    raise ValueError(f"unsupported activation: {act}")


# ----------------------------------------------------------------------------------
# Kernels
# ----------------------------------------------------------------------------------
def ffn_resident_kernel(x_ref, w1_ref, b1_ref, w2_ref, b2_ref, o_ref, *, act):
    """Weights fully VMEM-resident (constant index_map); grid = M tiles only."""
    h = jnp.dot(x_ref[...], w1_ref[...], preferred_element_type=jnp.float32)
    h = _activation(h + b1_ref[...].astype(jnp.float32), act)
    # dropout: identity (eval mode)
    out = jnp.dot(h.astype(w2_ref.dtype), w2_ref[...], preferred_element_type=jnp.float32)
    o_ref[...] = (out + b2_ref[...].astype(jnp.float32)).astype(o_ref.dtype)


def ffn_tiled_kernel(x_ref, w1_ref, b1_ref, w2_ref, b2_ref, o_ref, acc_ref, *, act):
    """Grid: (i over M tiles [parallel], j over hidden tiles [arbitrary, last])."""
    j = pl.program_id(1)

    h = jnp.dot(x_ref[...], w1_ref[...], preferred_element_type=jnp.float32)
    h = _activation(h + b1_ref[...].astype(jnp.float32), act)
    # dropout: identity (eval mode)
    h = h.astype(w2_ref.dtype)

    # No separate zero-init pass: first hidden step writes, later steps accumulate.
    @pl.when(j == 0)
    def _():
        acc_ref[...] = jnp.dot(h, w2_ref[...], preferred_element_type=jnp.float32)

    @pl.when(j > 0)
    def _():
        acc_ref[...] += jnp.dot(h, w2_ref[...], preferred_element_type=jnp.float32)

    @pl.when(j == pl.num_programs(1) - 1)
    def _():
        o_ref[...] = (acc_ref[...] + b2_ref[...].astype(jnp.float32)).astype(o_ref.dtype)


# ----------------------------------------------------------------------------------
# Tiling / VMEM heuristics (all static, trace-time Python)
# ----------------------------------------------------------------------------------
def _vmem_budget():
    try:
        cap = int(pltpu.get_tpu_info().vmem_capacity_bytes)
    except Exception:
        cap = 64 << 20  # conservative fallback: v7x physical per-core VMEM
    return int(cap * 0.85)  # ~15% headroom for compiler-managed temporaries


def _sublane_min(dtype):
    # packed-sublane minimum: f32 -> 8, bf16 -> 16, int8/fp8 -> 32
    return max(8, 32 // jnp.dtype(dtype).itemsize)


def _pick_tm(m, tm_req, sub):
    tm_eff = _round_up(min(tm_req, _round_up(m, sub)), sub)
    # Guarantee >=2 M tiles when there is enough work (v7x has 2 TensorCores).
    if m >= 2 * sub:
        tm_eff = min(tm_eff, _round_up(-(-m // 2), sub))
    m_pad = _round_up(m, tm_eff)
    # Bound M-padding waste to ~12.5% by shrinking tm.
    while tm_eff > sub and (m_pad - m) * 8 > m_pad:
        tm_eff = _round_up(max(sub, tm_eff // 2), sub)
        m_pad = _round_up(m, tm_eff)
    return tm_eff, m_pad


def _pick_th(hidden, th_req):
    """Return (th_eff, hidden_pad). Prefer divisors of `hidden` that are multiples of
    256 (full 256x256 MXU on v6e/v7x), then 128 (v5e), so no weight padding is needed."""
    if hidden <= th_req:
        return hidden, hidden
    for mult in (256, 128):
        hi = (min(th_req, hidden) // mult) * mult
        for cand in range(hi, 0, -mult):
            if hidden % cand == 0:
                return cand, hidden
    # Fallback: zero-pad hidden (exact: padded cols contribute 0 to the output).
    th_eff = max(128, (th_req // 128) * 128)
    return th_eff, _round_up(hidden, th_eff)


def _est_resident_bytes(tm, dim, hidden, xb, wb):
    return (2 * tm * dim * xb            # x blocks (double-buffered)
            + 2 * tm * dim * xb          # out blocks
            + 2 * dim * hidden * wb      # w1
            + 2 * 8 * hidden * wb        # b1 (padded sublanes)
            + 2 * hidden * dim * wb      # w2
            + 2 * 8 * dim * wb           # b2
            + 2 * tm * hidden * 4        # compiler-managed h intermediate (f32)
            + tm * dim * 4)              # f32 result before cast


def _est_tiled_bytes(tm, th, dim, xb, wb):
    return (2 * tm * dim * xb            # x blocks
            + 2 * tm * dim * xb          # out blocks
            + 2 * dim * th * wb          # w1 blocks
            + 2 * 8 * th * wb            # b1 blocks
            + 2 * th * dim * wb          # w2 blocks
            + 2 * 8 * dim * wb           # b2 blocks
            + tm * dim * 4               # f32 accumulator scratch
            + 2 * tm * th * 4)           # compiler-managed h intermediate (f32)


# ----------------------------------------------------------------------------------
# Wrapper
# ----------------------------------------------------------------------------------
@functools.partial(jax.jit,
                   static_argnames=("tm", "th", "activation", "allow_resident"))
def feed_forward_network(x, w1, b1, w2, b2, *, tm=1024, th=1024,
                         activation="gelu", allow_resident=True):
    """x: (..., dim). w1: (dim, hidden), b1: (hidden,), w2: (hidden, dim), b2: (dim,).
    Weights are stored pre-transposed vs. nn.Linear so the kernel computes x @ W."""
    orig_shape = x.shape
    dim = orig_shape[-1]
    hidden = w1.shape[1]

    x2d = x.reshape(-1, dim)
    m = x2d.shape[0]

    xb = jnp.dtype(x.dtype).itemsize
    wb = jnp.dtype(w1.dtype).itemsize
    sub = _sublane_min(x.dtype)
    vmem_budget = _vmem_budget()

    # ---------------- resident-weights fast path --------------------------------
    tm_res, m_pad_res = _pick_tm(m, min(tm, 512), sub)
    if allow_resident and _est_resident_bytes(tm_res, dim, hidden, xb, wb) <= vmem_budget:
        x_p = jnp.pad(x2d, ((0, m_pad_res - m), (0, 0))) if m_pad_res != m else x2d
        out = pl.pallas_call(
            functools.partial(ffn_resident_kernel, act=activation),
            out_shape=jax.ShapeDtypeStruct((m_pad_res, dim), x.dtype),
            grid_spec=pltpu.PrefetchScalarGridSpec(
                num_scalar_prefetch=0,
                grid=(m_pad_res // tm_res,),
                in_specs=[
                    pl.BlockSpec((tm_res, dim), lambda i: (i, 0)),   # x
                    pl.BlockSpec((dim, hidden), lambda i: (0, 0)),   # w1 (resident)
                    pl.BlockSpec((1, hidden), lambda i: (0, 0)),     # b1
                    pl.BlockSpec((hidden, dim), lambda i: (0, 0)),   # w2 (resident)
                    pl.BlockSpec((1, dim), lambda i: (0, 0)),        # b2
                ],
                out_specs=pl.BlockSpec((tm_res, dim), lambda i: (i, 0)),
            ),
            compiler_params=pltpu.CompilerParams(
                dimension_semantics=("parallel",),
                vmem_limit_bytes=vmem_budget,
            ),
        )(x_p, w1, b1.reshape(1, hidden), w2, b2.reshape(1, dim))
        if m_pad_res != m:
            out = out[:m]
        return out.reshape(orig_shape)

    # ---------------- hidden-reduction (tiled weights) path ---------------------
    # Shrink order keeps tm >= 512 (weight-stream arithmetic intensity), then
    # th >= 512/256 (accumulator RMW traffic), then smaller tiles as a last resort.
    shrink_plan = [("tm", 512), ("th", 512), ("th", 256), ("tm", 256),
                   ("th", 128), ("tm", 128), ("tm", 64), ("tm", 32), ("tm", 16), ("tm", 8)]
    tm_cur, th_cur = tm, th
    while True:
        tm_eff, m_pad = _pick_tm(m, tm_cur, sub)
        th_eff, hidden_pad = _pick_th(hidden, th_cur)
        if _est_tiled_bytes(tm_eff, th_eff, dim, xb, wb) <= vmem_budget or not shrink_plan:
            break
        axis, floor = shrink_plan.pop(0)
        if axis == "tm":
            tm_cur = min(tm_cur, floor)
        else:
            th_cur = min(th_cur, floor)

    if m_pad != m:
        x2d = jnp.pad(x2d, ((0, m_pad - m), (0, 0)))
    if hidden_pad != hidden:
        # Zero padding is exact: padded hidden columns contribute 0 to the output.
        w1 = jnp.pad(w1, ((0, 0), (0, hidden_pad - hidden)))
        b1 = jnp.pad(b1, ((0, hidden_pad - hidden),))
        w2 = jnp.pad(w2, ((0, hidden_pad - hidden), (0, 0)))

    grid = (m_pad // tm_eff, hidden_pad // th_eff)

    out = pl.pallas_call(
        functools.partial(ffn_tiled_kernel, act=activation),
        out_shape=jax.ShapeDtypeStruct((m_pad, dim), x.dtype),
        grid_spec=pltpu.PrefetchScalarGridSpec(
            num_scalar_prefetch=0,
            grid=grid,
            in_specs=[
                pl.BlockSpec((tm_eff, dim), lambda i, j: (i, 0)),    # x (resident over j)
                pl.BlockSpec((dim, th_eff), lambda i, j: (0, j)),    # w1 block
                pl.BlockSpec((1, th_eff), lambda i, j: (0, j)),      # b1 block
                pl.BlockSpec((th_eff, dim), lambda i, j: (j, 0)),    # w2 block
                pl.BlockSpec((1, dim), lambda i, j: (0, 0)),         # b2
            ],
            out_specs=pl.BlockSpec((tm_eff, dim), lambda i, j: (i, 0)),
            scratch_shapes=[pltpu.VMEM((tm_eff, dim), jnp.float32)],
        ),
        compiler_params=pltpu.CompilerParams(
            dimension_semantics=("parallel", "arbitrary"),
            vmem_limit_bytes=vmem_budget,
        ),
    )(x2d, w1, b1.reshape(1, hidden_pad), w2, b2.reshape(1, dim))

    if m_pad != m:
        out = out[:m]
    return out.reshape(orig_shape)


def init_params(key, dim, hidden_dim, dtype=jnp.float32):
    """Deterministic init mirroring nn.Linear shapes (weights stored pre-transposed)."""
    k1, k2, k3, k4 = jax.random.split(key, 4)
    bound1 = 1.0 / math.sqrt(dim)
    bound2 = 1.0 / math.sqrt(hidden_dim)
    w1 = jax.random.uniform(k1, (dim, hidden_dim), dtype, -bound1, bound1)
    b1 = jax.random.uniform(k2, (hidden_dim,), dtype, -bound1, bound1)
    w2 = jax.random.uniform(k3, (hidden_dim, dim), dtype, -bound2, bound2)
    b2 = jax.random.uniform(k4, (dim,), dtype, -bound2, bound2)
    return w1, b1, w2, b2


if __name__ == "__main__":
    # Small, 128-lane-aligned shapes. Exercises both code paths:
    #   (a) resident-weights fast path, (b) forced hidden-reduction path (th=256).
    batch, seq, dim, hidden_dim = 4, 96, 128, 512

    key = jax.random.PRNGKey(0)
    kx, kp = jax.random.split(key)
    x = jax.random.normal(kx, (batch, seq, dim), jnp.float32)
    w1, b1, w2, b2 = init_params(kp, dim, hidden_dim)

    # Reference in plain JAX (eval-mode dropout = identity, exact erf GeLU).
    h_ref = jax.nn.gelu(
        jnp.dot(x, w1, precision=jax.lax.Precision.HIGHEST) + b1, approximate=False)
    ref = jnp.dot(h_ref, w2, precision=jax.lax.Precision.HIGHEST) + b2

    out_res = feed_forward_network(x, w1, b1, w2, b2)
    jax.block_until_ready(out_res)

    out_tiled = feed_forward_network(x, w1, b1, w2, b2, th=256, allow_resident=False)
    jax.block_until_ready(out_tiled)

    assert out_res.shape == x.shape and out_tiled.shape == x.shape
    err_res = float(jnp.max(jnp.abs(out_res - ref)))
    err_tiled = float(jnp.max(jnp.abs(out_tiled - ref)))
    # MXU matmuls run at default precision (bf16 passes for f32 operands), so the
    # tolerance vs. the HIGHEST-precision reference is loose-ish but still catches
    # any structural bug (missing bias / activation / accumulation).
    assert err_res < 1e-2, ("resident path", err_res)
    assert err_tiled < 1e-2, ("tiled path", err_tiled)

    print("KERNEL_OK")
</pallas_src>

<mosaic_0001>
module attributes {stable_mosaic.version = 11 : i64} {
  func.func @ffn_resident_kernel(%arg0: i32, %arg1: memref<192x128xf32, #tpu.memory_space<vmem>>, %arg2: memref<128x512xf32, #tpu.memory_space<vmem>>, %arg3: memref<1x512xf32, #tpu.memory_space<vmem>>, %arg4: memref<512x128xf32, #tpu.memory_space<vmem>>, %arg5: memref<1x128xf32, #tpu.memory_space<vmem>>, %arg6: memref<192x128xf32, #tpu.memory_space<vmem>>) attributes {dimension_semantics = [#tpu.dimension_semantics<parallel>], iteration_bounds = array<i64: 2>, scalar_prefetch = 0 : i64, scratch_operands = 0 : i64, tpu.core_type = #tpu.core_type<tc>, window_params = [{transform_indices = @transform_0, window_bounds = array<i64: 192, 128>}, {pipeline_mode = #tpu.pipeline_mode<synchronous>, transform_indices = @transform_1, window_bounds = array<i64: 128, 512>}, {pipeline_mode = #tpu.pipeline_mode<synchronous>, transform_indices = @transform_2, window_bounds = array<i64: 1, 512>}, {pipeline_mode = #tpu.pipeline_mode<synchronous>, transform_indices = @transform_3, window_bounds = array<i64: 512, 128>}, {pipeline_mode = #tpu.pipeline_mode<synchronous>, transform_indices = @transform_4, window_bounds = array<i64: 1, 128>}, {transform_indices = @transform_5, window_bounds = array<i64: 192, 128>}]} {
    %c0 = arith.constant 0 : index
    %c0_0 = arith.constant 0 : index
    %0 = vector.load %arg1[%c0, %c0_0] : memref<192x128xf32, #tpu.memory_space<vmem>>, vector<192x128xf32>
    %c0_1 = arith.constant 0 : index
    %c0_2 = arith.constant 0 : index
    %1 = vector.load %arg2[%c0_1, %c0_2] : memref<128x512xf32, #tpu.memory_space<vmem>>, vector<128x512xf32>
    %cst = arith.constant dense<0.000000e+00> : vector<192x512xf32>
    %2 = tpu.matmul %0, %1, %cst {dimension_numbers = #tpu.dot_dimension_numbers<[1], [0], [0], [1], [0, 0, 1, 1], [], []>} : vector<192x128xf32>, vector<128x512xf32>, vector<192x512xf32> -> vector<192x512xf32>
    %c0_3 = arith.constant 0 : index
    %c0_4 = arith.constant 0 : index
    %3 = vector.load %arg3[%c0_3, %c0_4] : memref<1x512xf32, #tpu.memory_space<vmem>>, vector<1x512xf32>
    %4 = vector.broadcast %3 : vector<1x512xf32> to vector<192x512xf32>
    %5 = arith.addf %2, %4 : vector<192x512xf32>
    %cst_5 = arith.constant 5.000000e-01 : f32
    %6 = vector.broadcast %cst_5 : f32 to vector<192x512xf32>
    %7 = arith.mulf %6, %5 : vector<192x512xf32>
    %cst_6 = arith.constant 0.707106769 : f32
    %8 = vector.broadcast %cst_6 : f32 to vector<192x512xf32>
    %9 = arith.mulf %5, %8 : vector<192x512xf32>
    %10 = math.erf %9 : vector<192x512xf32>
    %cst_7 = arith.constant 1.000000e+00 : f32
    %11 = vector.broadcast %cst_7 : f32 to vector<192x512xf32>
    %12 = arith.addf %11, %10 : vector<192x512xf32>
    %13 = arith.mulf %7, %12 : vector<192x512xf32>
    %c0_8 = arith.constant 0 : index
    %c0_9 = arith.constant 0 : index
    %14 = vector.load %arg4[%c0_8, %c0_9] : memref<512x128xf32, #tpu.memory_space<vmem>>, vector<512x128xf32>
    %cst_10 = arith.constant dense<0.000000e+00> : vector<192x128xf32>
    %15 = tpu.matmul %13, %14, %cst_10 {dimension_numbers = #tpu.dot_dimension_numbers<[1], [0], [0], [1], [0, 0, 1, 1], [], []>} : vector<192x512xf32>, vector<512x128xf32>, vector<192x128xf32> -> vector<192x128xf32>
    %c0_11 = arith.constant 0 : index
    %c0_12 = arith.constant 0 : index
    %16 = vector.load %arg5[%c0_11, %c0_12] : memref<1x128xf32, #tpu.memory_space<vmem>>, vector<1x128xf32>
    %17 = vector.broadcast %16 : vector<1x128xf32> to vector<192x128xf32>
    %18 = arith.addf %15, %17 : vector<192x128xf32>
    %c0_13 = arith.constant 0 : index
    %c0_14 = arith.constant 0 : index
    %19 = vector.load %arg6[%c0_13, %c0_14] : memref<192x128xf32, #tpu.memory_space<vmem>>, vector<192x128xf32>
    tpu.vector_store %arg6[%c0_13, %c0_14], %18 {strides = array<i32>} : memref<192x128xf32, #tpu.memory_space<vmem>>, vector<192x128xf32>,
    return
  }
  func.func @transform_0(%arg0: i32) -> (i32, i32) {
    %c0_i32 = arith.constant 0 : i32
    %c0_i32_0 = arith.constant 0 : i32
    return %arg0, %c0_i32 : i32, i32
  }
  func.func @transform_1(%arg0: i32) -> (i32, i32) {
    %c0_i32 = arith.constant 0 : i32
    %c0_i32_0 = arith.constant 0 : i32
    %c0_i32_1 = arith.constant 0 : i32
    return %c0_i32, %c0_i32_0 : i32, i32
  }
  func.func @transform_2(%arg0: i32) -> (i32, i32) {
    %c0_i32 = arith.constant 0 : i32
    %c0_i32_0 = arith.constant 0 : i32
    %c0_i32_1 = arith.constant 0 : i32
    return %c0_i32, %c0_i32_0 : i32, i32
  }
  func.func @transform_3(%arg0: i32) -> (i32, i32) {
    %c0_i32 = arith.constant 0 : i32
    %c0_i32_0 = arith.constant 0 : i32
    %c0_i32_1 = arith.constant 0 : i32
    return %c0_i32, %c0_i32_0 : i32, i32
  }
  func.func @transform_4(%arg0: i32) -> (i32, i32) {
    %c0_i32 = arith.constant 0 : i32
    %c0_i32_0 = arith.constant 0 : i32
    %c0_i32_1 = arith.constant 0 : i32
    return %c0_i32, %c0_i32_0 : i32, i32
  }
  func.func @transform_5(%arg0: i32) -> (i32, i32) {
    %c0_i32 = arith.constant 0 : i32
    %c0_i32_0 = arith.constant 0 : i32
    return %arg0, %c0_i32 : i32, i32
  }
}

</mosaic_0001>

<llo_original>
// kernel: feed_forward_network.1
$region0: #{feed_forward_network.1}
  #allocation0 [shape = 'u32[]', space=smem, size = 0x4, offset = 0x4, fixed_abs, tag = 'smem constant byte address 0x4 - core index']
  #allocation1 [shape = 'u32[144,128]{1,0:T(1,128)}', space=vmem, size = 0x12000, scoped, tag = 'internal scratch']
  %s0 = inlined_call_operand.hbm [shape: f32[384,128], index: 0, kind: input, shape index: {}]
  %s1 = inlined_call_operand.hbm [shape: f32[128,512], index: 1, kind: input, shape index: {}]
  %s2 = inlined_call_operand.vmem [shape: f32[1,512], index: 2, kind: input, shape index: {}]
  %s3 = inlined_call_operand.hbm [shape: f32[512,128], index: 3, kind: input, shape index: {}]
  %s4 = inlined_call_operand.vmem [shape: f32[1,128], index: 4, kind: input, shape index: {}]
  %s5 = inlined_call_operand.hbm [shape: f32[384,128], index: 5, kind: output, shape index: {}]
  %s6 = sld [smem:[#allocation0]]
  $region65: #{feed_forward_network.1} parent=0
    _
  %s8 = ssub.s32 1, %s6
  %s9 = scalar_select 0, %s8, %s6
  $region1: #{feed_forward_network.1} parent=0
    #allocation2 [shape = 'u8[196608]{0}', space=vmem, size = 0x30000, scoped, tag = 'input window, operand 0']
    #allocation3 [shape = 's32[2]{0}', space=sflag, size = 0x8, scoped, tag = 'scoped memory for feed_forward_network.1']
    #allocation4 [shape = 's32[2]{0}', space=sflag, size = 0x8, scoped, tag = 'scoped memory for feed_forward_network.1']
    #allocation5 [shape = 'u8[262144]{0}', space=vmem, size = 0x40000, scoped, tag = 'input window, operand 1, single buffered']
    #allocation6 [shape = 's32[1]{0}', space=sflag, size = 0x4, scoped, tag = 'scoped memory for feed_forward_network.1']
    #allocation7 [shape = 'u8[262144]{0}', space=vmem, size = 0x40000, scoped, tag = 'input window, operand 3, single buffered']
    #allocation8 [shape = 'u8[196608]{0}', space=vmem, size = 0x30000, scoped, tag = 'output window, operand 0']
    %10 = vsyncpa [#allocation3], 0
    %s11 = scalar_lea.sflag [#allocation3], 1
    %12 = vsyncpa %s11, 0
    %13 = vsyncpa [#allocation6], 0
    %14 = vsyncpa [#allocation4], 0
    %s15 = scalar_lea.sflag [#allocation4], 1
    %16 = vsyncpa %s15, 0
    loop: start=0, step=1, limit=4
    $region2: #{feed_forward_network.1} parent=1 // loop_pre_header
      _
    $region3: #{feed_forward_network.1} parent=1 // loop_header
      %s18 = sphi 0, %s22
      %p19 = scmp.ge.s32.totalorder %s18, 4
      %s28 = sphi 0, %s30
      %s31 = sphi 0, %s28
      %s32 = sphi 0, %s31
      %s48 = sphi 0, %s32
      %s52 = sphi 0, %s52
      %s54 = sphi 0, %s52
      %s55 = sphi 0, %s54
      %s69 = sphi 0, %s55
      %s73 = sphi 0, %s73
      %s75 = sphi 0, %s73
      %s76 = sphi 0, %s75
      %s90 = sphi 0, %s76
      %s94 = sphi 0, %s94
      %s96 = sphi 0, %s94
      %s97 = sphi 0, %s96
      %s111 = sphi 0, %s97
      %s115 = sphi 0, %s115
      %s117 = sphi 0, %s115
      %s118 = sphi 0, %s117
      %s132 = sphi 0, %s118
      %s138 = sphi 0, %s140
      %s141 = sphi 0, %s138
      %s142 = sphi 0, %s141
      %s158 = sphi 0, %s142
    $region4: #{feed_forward_network.1} parent=1 // loop_header_branch
      %21 = sbr.rel (%p19) target = $region8
    $region5: #{feed_forward_network.1} parent=1 // loop_body
      %s23 = ssub.s32 %s18, 1
      %s24 = ssub.s32 %s18, 2
      %s25 = sadd.s32 %s18, 1
      %s26 = ssub.s32 %s18, %s25
      %p27 = scmp.eq.s32.totalorder %s26, 0
      %s29 = sadd.s32 %s28, 1
      %s30 = scalar_select %p27, %s28, %s29
      %p33 = pneg %p27
      %p34 = scmp.eq.s32.totalorder %s18, 1
      %p35 = por %p33, %p34
      %p36 = scmp.ne.s32.totalorder %s28, %s31
      %p37 = scmp.eq.s32.totalorder %s18, 0
      %p38 = por %p36, %p37
      %p39 = scmp.ne.s32.totalorder %s28, %s31
      %p40 = scmp.eq.s32.totalorder %s23, 1
      %p41 = por %p39, %p40
      %p42 = scmp.ne.s32.totalorder %s31, %s32
      %p43 = scmp.eq.s32.totalorder %s23, 0
      %p44 = por %p42, %p43
      %p45 = scmp.ne.s32.totalorder %s31, %s32
      %p46 = scmp.eq.s32.totalorder %s24, 1
      %p47 = por %p45, %p46
      %p49 = scmp.ne.s32.totalorder %s32, %s48
      %p50 = scmp.eq.s32.totalorder %s24, 0
      %p51 = por %p49, %p50
      %s53 = sadd.s32 %s52, 1
      %p56 = scmp.eq.s32.totalorder %s18, 1
      %p57 = scmp.ne.s32.totalorder %s52, %s54
      %p58 = scmp.eq.s32.totalorder %s18, 0
      %p59 = por %p57, %p58
      %p60 = scmp.ne.s32.totalorder %s52, %s54
      %p61 = scmp.eq.s32.totalorder %s23, 1
      %p62 = por %p60, %p61
      %p63 = scmp.ne.s32.totalorder %s54, %s55
      %p64 = scmp.eq.s32.totalorder %s23, 0
      %p65 = por %p63, %p64
      %p66 = scmp.ne.s32.totalorder %s54, %s55
      %p67 = scmp.eq.s32.totalorder %s24, 1
      %p68 = por %p66, %p67
      %p70 = scmp.ne.s32.totalorder %s55, %s69
      %p71 = scmp.eq.s32.totalorder %s24, 0
      %p72 = por %p70, %p71
      %s74 = sadd.s32 %s73, 1
      %p77 = scmp.eq.s32.totalorder %s18, 1
      %p78 = scmp.ne.s32.totalorder %s73, %s75
      %p79 = scmp.eq.s32.totalorder %s18, 0
      %p80 = por %p78, %p79
      %p81 = scmp.ne.s32.totalorder %s73, %s75
      %p82 = scmp.eq.s32.totalorder %s23, 1
      %p83 = por %p81, %p82
      %p84 = scmp.ne.s32.totalorder %s75, %s76
      %p85 = scmp.eq.s32.totalorder %s23, 0
      %p86 = por %p84, %p85
      %p87 = scmp.ne.s32.totalorder %s75, %s76
      %p88 = scmp.eq.s32.totalorder %s24, 1
      %p89 = por %p87, %p88
      %p91 = scmp.ne.s32.totalorder %s76, %s90
      %p92 = scmp.eq.s32.totalorder %s24, 0
      %p93 = por %p91, %p92
      %s95 = sadd.s32 %s94, 1
      %p98 = scmp.eq.s32.totalorder %s18, 1
      %p99 = scmp.ne.s32.totalorder %s94, %s96
      %p100 = scmp.eq.s32.totalorder %s18, 0
      %p101 = por %p99, %p100
      %p102 = scmp.ne.s32.totalorder %s94, %s96
      %p103 = scmp.eq.s32.totalorder %s23, 1
      %p104 = por %p102, %p103
      %p105 = scmp.ne.s32.totalorder %s96, %s97
      %p106 = scmp.eq.s32.totalorder %s23, 0
      %p107 = por %p105, %p106
      %p108 = scmp.ne.s32.totalorder %s96, %s97
      %p109 = scmp.eq.s32.totalorder %s24, 1
      %p110 = por %p108, %p109
      %p112 = scmp.ne.s32.totalorder %s97, %s111
      %p113 = scmp.eq.s32.totalorder %s24, 0
      %p114 = por %p112, %p113
      %s116 = sadd.s32 %s115, 1
      %p119 = scmp.eq.s32.totalorder %s18, 1
      %p120 = scmp.ne.s32.totalorder %s115, %s117
      %p121 = scmp.eq.s32.totalorder %s18, 0
      %p122 = por %p120, %p121
      %p123 = scmp.ne.s32.totalorder %s115, %s117
      %p124 = scmp.eq.s32.totalorder %s23, 1
      %p125 = por %p123, %p124
      %p126 = scmp.ne.s32.totalorder %s117, %s118
      %p127 = scmp.eq.s32.totalorder %s23, 0
      %p128 = por %p126, %p127
      %p129 = scmp.ne.s32.totalorder %s117, %s118
      %p130 = scmp.eq.s32.totalorder %s24, 1
      %p131 = por %p129, %p130
      %p133 = scmp.ne.s32.totalorder %s118, %s132
      %p134 = scmp.eq.s32.totalorder %s24, 0
      %p135 = por %p133, %p134
      %s136 = ssub.s32 %s18, %s25
      %p137 = scmp.eq.s32.totalorder %s136, 0
      %s139 = sadd.s32 %s138, 1
      %s140 = scalar_select %p137, %s138, %s139
      %p143 = pneg %p137
      %p144 = scmp.eq.s32.totalorder %s18, 1
      %p145 = por %p143, %p144
      %p146 = scmp.ne.s32.totalorder %s138, %s141
      %p147 = scmp.eq.s32.totalorder %s18, 0
      %p148 = por %p146, %p147
      %p149 = scmp.ne.s32.totalorder %s138, %s141
      %p150 = scmp.eq.s32.totalorder %s23, 1
      %p151 = por %p149, %p150
      %p152 = scmp.ne.s32.totalorder %s141, %s142
      %p153 = scmp.eq.s32.totalorder %s23, 0
      %p154 = por %p152, %p153
      %p155 = scmp.ne.s32.totalorder %s141, %s142
      %p156 = scmp.eq.s32.totalorder %s24, 1
      %p157 = por %p155, %p156
      %p159 = scmp.ne.s32.totalorder %s142, %s158
      %p160 = scmp.eq.s32.totalorder %s24, 0
      %p161 = por %p159, %p160
      %p162 = scmp.le.s32.totalorder 1, %s18
      %p163 = scmp.lt.s32.totalorder %s18, 3
      %p164 = pnand %p162, %p163
      %p165 = pneg %p164
      // Predicated region
      $region9: #{feed_forward_network.1} parent=5 // pred_check
        _
      $region10: #{feed_forward_network.1} parent=5 // pred_check_branch
        %167 = sbr.rel (%p164) target = $region12
      $region11: #{feed_forward_network.1} parent=5 // pred_region
        %s168 = ssub.s32 %s18, 1
        // Predicated region
        $region13: #{feed_forward_network.1} parent=11 // pred_check
          %p169 = pneg %p65
        $region14: #{feed_forward_network.1} parent=11 // pred_check_branch
          %171 = sbr.rel (%p169) target = $region16
        $region15: #{feed_forward_network.1} parent=11 // pred_region
          %s173 = ssub.s32 8192, 8192
          %174 = vsyncadd [#allocation6], %s173
          %s175 = sshll.u32 [#allocation5], 4
          %s176 = int_to_ptr.vmem [resolvable:$true] %s175
          %181 = dma.hbm_to_vmem [thread:$0]  %s1, 8192, %s176, [#allocation6], 512, 512, 32
        $region16: #{feed_forward_network.1} parent=11 // pred_fallthru
          _
        // Predicated region
        $region17: #{feed_forward_network.1} parent=11 // pred_check
          %p182 = pneg %p86
        $region18: #{feed_forward_network.1} parent=11 // pred_check_branch
          %184 = sbr.rel (%p182) target = $region20
        $region19: #{feed_forward_network.1} parent=11 // pred_region
          _
        $region20: #{feed_forward_network.1} parent=11 // pred_fallthru
          _
        // Predicated region
        $region21: #{feed_forward_network.1} parent=11 // pred_check
          %p185 = pneg %p107
        $region22: #{feed_forward_network.1} parent=11 // pred_check_branch
          %187 = sbr.rel (%p185) target = $region24
        $region23: #{feed_forward_network.1} parent=11 // pred_region
          %s189 = ssub.s32 8192, 8192
          %190 = vsyncadd [#allocation6], %s189
          %s191 = sshll.u32 [#allocation7], 4
          %s192 = int_to_ptr.vmem [resolvable:$true] %s191
          %197 = dma.hbm_to_vmem [thread:$0]  %s3, 8192, %s192, [#allocation6], 128, 128, 8
        $region24: #{feed_forward_network.1} parent=11 // pred_fallthru
          _
        // Predicated region
        $region25: #{feed_forward_network.1} parent=11 // pred_check
          %p198 = pneg %p128
        $region26: #{feed_forward_network.1} parent=11 // pred_check_branch
          %200 = sbr.rel (%p198) target = $region28
        $region27: #{feed_forward_network.1} parent=11 // pred_region
          _
        $region28: #{feed_forward_network.1} parent=11 // pred_fallthru
          _
      $region12: #{feed_forward_network.1} parent=5 // pred_fallthru
        _
      %p201 = scmp.lt.s32.totalorder %s18, 2
      // Predicated region
      $region29: #{feed_forward_network.1} parent=5 // pred_check
        %p202 = pneg %p201
      $region30: #{feed_forward_network.1} parent=5 // pred_check_branch
        %204 = sbr.rel (%p202) target = $region32
      $region31: #{feed_forward_network.1} parent=5 // pred_region
        // Predicated region
        $region33: #{feed_forward_network.1} parent=31 // pred_check
          %p205 = pneg %p38
        $region34: #{feed_forward_network.1} parent=31 // pred_check_branch
          %207 = sbr.rel (%p205) target = $region36
        $region35: #{feed_forward_network.1} parent=31 // pred_region
          %s208 = sand.u32 %s28, 1
          %s209 = scalar_lea.sflag [#allocation3], %s208
          %s210 = sand.u32 %s28, 1
          %s211 = smul.addr %s210, 192
          %s212 = scalar_lea.vmem [#allocation2], %s211
          %s213 = smul.u32 24, %s18
          %s215 = ssub.s32 3072, 3072
          %216 = vsyncadd %s209, %s215
          %s217 = smul.addr %s213, 128
          %s218 = scalar_lea.hbm %s0, %s217
          %s219 = sshll.u32 %s212, 4
          %s220 = int_to_ptr.vmem [resolvable:$true] %s219
          %225 = dma.hbm_to_vmem [thread:$0]  %s218, 3072, %s220, %s209, 128, 128, 8
        $region36: #{feed_forward_network.1} parent=31 // pred_fallthru
          _
      $region32: #{feed_forward_network.1} parent=5 // pred_fallthru
        _
      %p226 = scmp.le.s32.totalorder 1, %s18
      %p227 = scmp.lt.s32.totalorder %s18, 3
      %p228 = pnand %p226, %p227
      %p229 = pneg %p228
      // Predicated region
      $region37: #{feed_forward_network.1} parent=5 // pred_check
        _
      $region38: #{feed_forward_network.1} parent=5 // pred_check_branch
        %231 = sbr.rel (%p228) target = $region40
      $region39: #{feed_forward_network.1} parent=5 // pred_region
        %s232 = ssub.s32 %s18, 1
        %s233 = sand.u32 %s31, 1
        %s234 = scalar_lea.sflag [#allocation3], %s233
        %s235 = sand.u32 %s31, 1
        %s236 = smul.addr %s235, 192
        %s237 = scalar_lea.vmem [#allocation2], %s236
        // Predicated region
        $region41: #{feed_forward_network.1} parent=39 // pred_check
          %p238 = pneg %p44
        $region42: #{feed_forward_network.1} parent=39 // pred_check_branch
          %240 = sbr.rel (%p238) target = $region44
        $region43: #{feed_forward_network.1} parent=39 // pred_region
          %241 = dma.done %s234, 3072
        $region44: #{feed_forward_network.1} parent=39 // pred_fallthru
          _
        // Predicated region
        $region45: #{feed_forward_network.1} parent=39 // pred_check
          %p242 = pneg %p65
        $region46: #{feed_forward_network.1} parent=39 // pred_check_branch
          %244 = sbr.rel (%p242) target = $region48
        $region47: #{feed_forward_network.1} parent=39 // pred_region
          %245 = dma.done [#allocation6], 8192
        $region48: #{feed_forward_network.1} parent=39 // pred_fallthru
          _
        // Predicated region
        $region49: #{feed_forward_network.1} parent=39 // pred_check
          %p246 = pneg %p107
        $region50: #{feed_forward_network.1} parent=39 // pred_check_branch
          %248 = sbr.rel (%p246) target = $region52
        $region51: #{feed_forward_network.1} parent=39 // pred_region
          %249 = dma.done [#allocation6], 8192
        $region52: #{feed_forward_network.1} parent=39 // pred_fallthru
          _
        %s250 = sand.u32 %s31, 1
        %s251 = scalar_lea.sflag [#allocation3], %s250
        %s252 = sand.u32 %s31, 1
        %s253 = smul.addr %s252, 192
        %s254 = scalar_lea.vmem [#allocation2], %s253
        %p255 = pneg %p44
        %p256 = pneg %p41
        %p257 = pneg %p65
        %p258 = pneg %p62
        %p259 = pneg %p86
        %p260 = pneg %p83
        %p261 = pneg %p107
        %p262 = pneg %p104
        %p263 = pneg %p128
        %p264 = pneg %p125
        %p265 = pneg %p154
        %p266 = pneg %p151
        %s267 = sand.u32 %s141, 1
        %s268 = scalar_lea.sflag [#allocation4], %s267
        %s269 = sand.u32 %s141, 1
        %s270 = smul.addr %s269, 192
        %s271 = scalar_lea.vmem [#allocation8], %s270
        %s272 = smul.u32 24, %s23
        %s273 = smul.u32 24, %s23
        %v274 = vld [vmem:[%s237] sm:$0xff]
        %v275 = vld [vmem:[%s237 + $0x8] sm:$0xff]
        %v276 = vld [vmem:[%s237 + $0x10] sm:$0xff]
        %v277 = vld [vmem:[%s237 + $0x18] sm:$0xff]
        %v278 = vld [vmem:[%s237 + $0x20] sm:$0xff]
        %v279 = vld [vmem:[%s237 + $0x28] sm:$0xff]
        %v280 = vld [vmem:[%s237 + $0x30] sm:$0xff]
        %v281 = vld [vmem:[%s237 + $0x38] sm:$0xff]
        %v282 = vld [vmem:[%s237 + $0x40] sm:$0xff]
        %v283 = vld [vmem:[%s237 + $0x48] sm:$0xff]
        %v284 = vld [vmem:[%s237 + $0x50] sm:$0xff]
        %v285 = vld [vmem:[%s237 + $0x58] sm:$0xff]
        %v286 = vld [vmem:[%s237 + $0x60] sm:$0xff]
        %v287 = vld [vmem:[%s237 + $0x68] sm:$0xff]
        %v288 = vld [vmem:[%s237 + $0x70] sm:$0xff]
        %v289 = vld [vmem:[%s237 + $0x78] sm:$0xff]
        %v290 = vld [vmem:[%s237 + $0x80] sm:$0xff]
        %v291 = vld [vmem:[%s237 + $0x88] sm:$0xff]
        %v292 = vld [vmem:[%s237 + $0x90] sm:$0xff]
        %v293 = vld [vmem:[%s237 + $0x98] sm:$0xff]
        %v294 = vld [vmem:[%s237 + $0xa0] sm:$0xff]
        %v295 = vld [vmem:[%s237 + $0xa8] sm:$0xff]
        %v296 = vld [vmem:[%s237 + $0xb0] sm:$0xff]
        %v297 = vld [vmem:[%s237 + $0xb8] sm:$0xff]
        %v298 = vld [vmem:[#allocation5] sm:$0xff]
        %v299 = vld [vmem:[#allocation5 + $0x8] sm:$0xff]
        %v300 = vld [vmem:[#allocation5 + $0x10] sm:$0xff]
        %v301 = vld [vmem:[#allocation5 + $0x18] sm:$0xff]
        %v302 = vld [vmem:[#allocation5 + $0x20] sm:$0xff]
        %v303 = vld [vmem:[#allocation5 + $0x28] sm:$0xff]
        %v304 = vld [vmem:[#allocation5 + $0x30] sm:$0xff]
        %v305 = vld [vmem:[#allocation5 + $0x38] sm:$0xff]
        %v306 = vld [vmem:[#allocation5 + $0x40] sm:$0xff]
        %v307 = vld [vmem:[#allocation5 + $0x48] sm:$0xff]
        %v308 = vld [vmem:[#allocation5 + $0x50] sm:$0xff]
        %v309 = vld [vmem:[#allocation5 + $0x58] sm:$0xff]
        %v310 = vld [vmem:[#allocation5 + $0x60] sm:$0xff]
        %v311 = vld [vmem:[#allocation5 + $0x68] sm:$0xff]
        %v312 = vld [vmem:[#allocation5 + $0x70] sm:$0xff]
        %v313 = vld [vmem:[#allocation5 + $0x78] sm:$0xff]
        %v314 = vld [vmem:[#allocation5 + $0x80] sm:$0xff]
        %v315 = vld [vmem:[#allocation5 + $0x88] sm:$0xff]
        %v316 = vld [vmem:[#allocation5 + $0x90] sm:$0xff]
        %v317 = vld [vmem:[#allocation5 + $0x98] sm:$0xff]
        %v318 = vld [vmem:[#allocation5 + $0xa0] sm:$0xff]
        %v319 = vld [vmem:[#allocation5 + $0xa8] sm:$0xff]
        %v320 = vld [vmem:[#allocation5 + $0xb0] sm:$0xff]
        %v321 = vld [vmem:[#allocation5 + $0xb8] sm:$0xff]
        %v322 = vld [vmem:[#allocation5 + $0xc0] sm:$0xff]
        %v323 = vld [vmem:[#allocation5 + $0xc8] sm:$0xff]
        %v324 = vld [vmem:[#allocation5 + $0xd0] sm:$0xff]
        %v325 = vld [vmem:[#allocation5 + $0xd8] sm:$0xff]
        %v326 = vld [vmem:[#allocation5 + $0xe0] sm:$0xff]
        %v327 = vld [vmem:[#allocation5 + $0xe8] sm:$0xff]
        %v328 = vld [vmem:[#allocation5 + $0xf0] sm:$0xff]
        %v329 = vld [vmem:[#allocation5 + $0xf8] sm:$0xff]
        %v330 = vld [vmem:[#allocation5 + $0x100] sm:$0xff]
        %v331 = vld [vmem:[#allocation5 + $0x108] sm:$0xff]
        %v332 = vld [vmem:[#allocation5 + $0x110] sm:$0xff]
        %v333 = vld [vmem:[#allocation5 + $0x118] sm:$0xff]
        %v334 = vld [vmem:[#allocation5 + $0x120] sm:$0xff]
        %v335 = vld [vmem:[#allocation5 + $0x128] sm:$0xff]
        %v336 = vld [vmem:[#allocation5 + $0x130] sm:$0xff]
        %v337 = vld [vmem:[#allocation5 + $0x138] sm:$0xff]
        %v338 = vld [vmem:[#allocation5 + $0x140] sm:$0xff]
        %v339 = vld [vmem:[#allocation5 + $0x148] sm:$0xff]
        %v340 = vld [vmem:[#allocation5 + $0x150] sm:$0xff]
        %v341 = vld [vmem:[#allocation5 + $0x158] sm:$0xff]
        %v342 = vld [vmem:[#allocation5 + $0x160] sm:$0xff]
        %v343 = vld [vmem:[#allocation5 + $0x168] sm:$0xff]
        %v344 = vld [vmem:[#allocation5 + $0x170] sm:$0xff]
        %v345 = vld [vmem:[#allocation5 + $0x178] sm:$0xff]
        %v346 = vld [vmem:[#allocation5 + $0x180] sm:$0xff]
        %v347 = vld [vmem:[#allocation5 + $0x188] sm:$0xff]
        %v348 = vld [vmem:[#allocation5 + $0x190] sm:$0xff]
        %v349 = vld [vmem:[#allocation5 + $0x198] sm:$0xff]
        %v350 = vld [vmem:[#allocation5 + $0x1a0] sm:$0xff]
        %v351 = vld [vmem:[#allocation5 + $0x1a8] sm:$0xff]
        %v352 = vld [vmem:[#allocation5 + $0x1b0] sm:$0xff]
        %v353 = vld [vmem:[#allocation5 + $0x1b8] sm:$0xff]
        %v354 = vld [vmem:[#allocation5 + $0x1c0] sm:$0xff]
        %v355 = vld [vmem:[#allocation5 + $0x1c8] sm:$0xff]
        %v356 = vld [vmem:[#allocation5 + $0x1d0] sm:$0xff]
        %v357 = vld [vmem:[#allocation5 + $0x1d8] sm:$0xff]
        %v358 = vld [vmem:[#allocation5 + $0x1e0] sm:$0xff]
        %v359 = vld [vmem:[#allocation5 + $0x1e8] sm:$0xff]
        %v360 = vld [vmem:[#allocation5 + $0x1f0] sm:$0xff]
        %v361 = vld [vmem:[#allocation5 + $0x1f8] sm:$0xff]
        %v362 = vld [vmem:[%s2] sm:$0xf]
        %v364 = vlaneseq
        %v365 = vshrl.u32 %v364, 7
        %v366 = vsub.s32 0, %v365
        %v367 = vrot.slane %v362, %v366
        %v368 = vlaneseq
        %v369 = vshrl.u32 %v368, 7
        %v370 = vsub.s32 1, %v369
        %v371 = vrot.slane %v362, %v370
        %v372 = vlaneseq
        %v373 = vshrl.u32 %v372, 7
        %v374 = vsub.s32 2, %v373
        %v375 = vrot.slane %v362, %v374
        %v376 = vlaneseq
        %v377 = vshrl.u32 %v376, 7
        %v378 = vsub.s32 3, %v377
        %v379 = vrot.slane %v362, %v378
        %384 = vmatprep.subr.mxu0 %v299
        %385 = vmatpush1.msra.mxu0 %v298
        %386 = vmatprep.subr.mxu0 %v303
        %387 = vmatpush1.msra.mxu0 %v302
        %388 = vmatprep.subr.mxu0 %v307
        %389 = vmatpush1.msra.mxu0 %v306
        %390 = vmatprep.subr.mxu0 %v311
        %391 = vmatpush1.msra.mxu0 %v310
        %392 = vmatprep.subr.mxu0 %v315
        %393 = vmatpush1.msra.mxu0 %v314
        %394 = vmatprep.subr.mxu0 %v319
        %395 = vmatpush1.msra.mxu0 %v318
        %396 = vmatprep.subr.mxu0 %v323
        %397 = vmatpush1.msra.mxu0 %v322
        %398 = vmatprep.subr.mxu0 %v327
        %399 = vmatpush1.msra.mxu0 %v326
        %400 = vmatprep.subr.mxu0 %v331
        %401 = vmatpush1.msra.mxu0 %v330
        %402 = vmatprep.subr.mxu0 %v335
        %403 = vmatpush1.msra.mxu0 %v334
        %404 = vmatprep.subr.mxu0 %v339
        %405 = vmatpush1.msra.mxu0 %v338
        %406 = vmatprep.subr.mxu0 %v343
        %407 = vmatpush1.msra.mxu0 %v342
        %408 = vmatprep.subr.mxu0 %v347
        %409 = vmatpush1.msra.mxu0 %v346
        %410 = vmatprep.subr.mxu0 %v351
        %411 = vmatpush1.msra.mxu0 %v350
        %412 = vmatprep.subr.mxu0 %v355
        %413 = vmatpush1.msra.mxu0 %v354
        %414 = vmatprep.subr.mxu0 %v359
        %415 = vmatpush1.msra.mxu0 %v358
        %416 = vmatprep.subr.mxu0 0.0
        %417 = vmatpush1.msra.mxu0 0.0
        %418 = vmatprep.subr.mxu0 0.0
        %419 = vmatpush1.msra.mxu0 0.0
        %420 = vmatprep.subr.mxu0 0.0
        %421 = vmatpush1.msra.mxu0 0.0
        %422 = vmatprep.subr.mxu0 0.0
        %423 = vmatpush1.msra.mxu0 0.0
        %424 = vmatprep.subr.mxu0 0.0
        %425 = vmatpush1.msra.mxu0 0.0
        %426 = vmatprep.subr.mxu0 0.0
        %427 = vmatpush1.msra.mxu0 0.0
        %428 = vmatprep.subr.mxu0 0.0
        %429 = vmatpush1.msra.mxu0 0.0
        %430 = vmatprep.subr.mxu0 0.0
        %431 = vmatpush1.msra.mxu0 0.0
        %432 = vmatprep.subr.mxu0 0.0
        %433 = vmatpush1.msra.mxu0 0.0
        %434 = vmatprep.subr.mxu0 0.0
        %435 = vmatpush1.msra.mxu0 0.0
        %436 = vmatprep.subr.mxu0 0.0
        %437 = vmatpush1.msra.mxu0 0.0
        %438 = vmatprep.subr.mxu0 0.0
        %439 = vmatpush1.msra.mxu0 0.0
        %440 = vmatprep.subr.mxu0 0.0
        %441 = vmatpush1.msra.mxu0 0.0
        %442 = vmatprep.subr.mxu0 0.0
        %443 = vmatpush1.msra.mxu0 0.0
        %444 = vmatprep.subr.mxu0 0.0
        %445 = vmatpush1.msra.mxu0 0.0
        %446 = vmatprep.subr.mxu0 0.0
        %447 = vmatpush1.msra.mxu0 0.0
        %448 = vmatprep.mubr.f32.mxu0 0.0
        %449 = vmatmul.mubr.f32.gmra.mrb[0].mxu0 %v274
        %v450 = vpop.f32.mrb[0].mxu0
        %v451 = vadd.f32 %v367, %v450
        %v452 = vpop.f32.mrb[0].mxu0
        %v453 = vadd.f32 %v371, %v452
        %454 = vmatprep.mubr.f32.mxu0 0.0
        %455 = vmatmul.mubr.f32.gmra.mrb[0].mxu0 %v275
        %v456 = vpop.f32.mrb[0].mxu0
        %v457 = vadd.f32 %v367, %v456
        %v458 = vpop.f32.mrb[0].mxu0
        %v459 = vadd.f32 %v371, %v458
        %460 = vmatprep.mubr.f32.mxu0 0.0
        %461 = vmatmul.mubr.f32.gmra.mrb[0].mxu0 %v276
        %v462 = vpop.f32.mrb[0].mxu0
        %v463 = vadd.f32 %v367, %v462
        %v464 = vpop.f32.mrb[0].mxu0
        %v465 = vadd.f32 %v371, %v464
        %466 = vmatprep.mubr.f32.mxu0 0.0
        %467 = vmatmul.mubr.f32.gmra.mrb[0].mxu0 %v277
        %v468 = vpop.f32.mrb[0].mxu0
        %v469 = vadd.f32 %v367, %v468
        %v470 = vpop.f32.mrb[0].mxu0
        %v471 = vadd.f32 %v371, %v470
        %472 = vmatprep.mubr.f32.mxu0 0.0
        %473 = vmatmul.mubr.f32.gmra.mrb[0].mxu0 %v278
        %v474 = vpop.f32.mrb[0].mxu0
        %v475 = vadd.f32 %v367, %v474
        %v476 = vpop.f32.mrb[0].mxu0
        %v477 = vadd.f32 %v371, %v476
        %478 = vmatprep.mubr.f32.mxu0 0.0
        %479 = vmatmul.mubr.f32.gmra.mrb[0].mxu0 %v279
        %v480 = vpop.f32.mrb[0].mxu0
        %v481 = vadd.f32 %v367, %v480
        %v482 = vpop.f32.mrb[0].mxu0
        %v483 = vadd.f32 %v371, %v482
        %484 = vmatprep.mubr.f32.mxu0 0.0
        %485 = vmatmul.mubr.f32.gmra.mrb[0].mxu0 %v280
        %v486 = vpop.f32.mrb[0].mxu0
        %v487 = vadd.f32 %v367, %v486
        %v488 = vpop.f32.mrb[0].mxu0
        %v489 = vadd.f32 %v371, %v488
        %490 = vmatprep.mubr.f32.mxu0 0.0
        %491 = vmatmul.mubr.f32.gmra.mrb[0].mxu0 %v281
        %v492 = vpop.f32.mrb[0].mxu0
        %v493 = vadd.f32 %v367, %v492
        %v494 = vpop.f32.mrb[0].mxu0
        %v495 = vadd.f32 %v371, %v494
        %496 = vmatprep.mubr.f32.mxu0 0.0
        %497 = vmatmul.mubr.f32.gmra.mrb[0].mxu0 %v282
        %v498 = vpop.f32.mrb[0].mxu0
        %v499 = vadd.f32 %v367, %v498
        %v500 = vpop.f32.mrb[0].mxu0
        %v501 = vadd.f32 %v371, %v500
        %502 = vmatprep.mubr.f32.mxu0 0.0
        %503 = vmatmul.mubr.f32.gmra.mrb[0].mxu0 %v283
        %v504 = vpop.f32.mrb[0].mxu0
        %v505 = vadd.f32 %v367, %v504
        %v506 = vpop.f32.mrb[0].mxu0
        %v507 = vadd.f32 %v371, %v506
        %508 = vmatprep.mubr.f32.mxu0 0.0
        %509 = vmatmul.mubr.f32.gmra.mrb[0].mxu0 %v284
        %v510 = vpop.f32.mrb[0].mxu0
        %v511 = vadd.f32 %v367, %v510
        %v512 = vpop.f32.mrb[0].mxu0
        %v513 = vadd.f32 %v371, %v512
        %514 = vmatprep.mubr.f32.mxu0 0.0
        %515 = vmatmul.mubr.f32.gmra.mrb[0].mxu0 %v285
        %v516 = vpop.f32.mrb[0].mxu0
        %v517 = vadd.f32 %v367, %v516
        %v518 = vpop.f32.mrb[0].mxu0
        %v519 = vadd.f32 %v371, %v518
        %520 = vmatprep.mubr.f32.mxu0 0.0
        %521 = vmatmul.mubr.f32.gmra.mrb[0].mxu0 %v286
        %v522 = vpop.f32.mrb[0].mxu0
        %v523 = vadd.f32 %v367, %v522
        %v524 = vpop.f32.mrb[0].mxu0
        %v525 = vadd.f32 %v371, %v524
        %526 = vmatprep.mubr.f32.mxu0 0.0
        %527 = vmatmul.mubr.f32.gmra.mrb[0].mxu0 %v287
        %v528 = vpop.f32.mrb[0].mxu0
        %v529 = vadd.f32 %v367, %v528
        %v530 = vpop.f32.mrb[0].mxu0
        %v531 = vadd.f32 %v371, %v530
        %532 = vmatprep.mubr.f32.mxu0 0.0
        %533 = vmatmul.mubr.f32.gmra.mrb[0].mxu0 %v288
        %v534 = vpop.f32.mrb[0].mxu0
        %v535 = vadd.f32 %v367, %v534
        %v536 = vpop.f32.mrb[0].mxu0
        %v537 = vadd.f32 %v371, %v536
        %538 = vmatprep.mubr.f32.mxu0 0.0
        %539 = vmatmul.mubr.f32.gmra.mrb[0].mxu0 %v289
        %v540 = vpop.f32.mrb[0].mxu0
        %v541 = vadd.f32 %v367, %v540
        %v542 = vpop.f32.mrb[0].mxu0
        %v543 = vadd.f32 %v371, %v542
        %544 = vmatprep.mubr.f32.mxu0 0.0
        %545 = vmatmul.mubr.f32.gmra.mrb[0].mxu0 %v290
        %v546 = vpop.f32.mrb[0].mxu0
        %v547 = vadd.f32 %v367, %v546
        %v548 = vpop.f32.mrb[0].mxu0
        %v549 = vadd.f32 %v371, %v548
        %550 = vmatprep.mubr.f32.mxu0 0.0
        %551 = vmatmul.mubr.f32.gmra.mrb[0].mxu0 %v291
        %v552 = vpop.f32.mrb[0].mxu0
        %v553 = vadd.f32 %v367, %v552
        %v554 = vpop.f32.mrb[0].mxu0
        %v555 = vadd.f32 %v371, %v554
        %556 = vmatprep.mubr.f32.mxu0 0.0
        %557 = vmatmul.mubr.f32.gmra.mrb[0].mxu0 %v292
        %v558 = vpop.f32.mrb[0].mxu0
        %v559 = vadd.f32 %v367, %v558
        %v560 = vpop.f32.mrb[0].mxu0
        %v561 = vadd.f32 %v371, %v560
        %562 = vmatprep.mubr.f32.mxu0 0.0
        %563 = vmatmul.mubr.f32.gmra.mrb[0].mxu0 %v293
        %v564 = vpop.f32.mrb[0].mxu0
        %v565 = vadd.f32 %v367, %v564
        %v566 = vpop.f32.mrb[0].mxu0
        %v567 = vadd.f32 %v371, %v566
        %568 = vmatprep.mubr.f32.mxu0 0.0
        %569 = vmatmul.mubr.f32.gmra.mrb[0].mxu0 %v294
        %v570 = vpop.f32.mrb[0].mxu0
        %v571 = vadd.f32 %v367, %v570
        %v572 = vpop.f32.mrb[0].mxu0
        %v573 = vadd.f32 %v371, %v572
        %574 = vmatprep.mubr.f32.mxu0 0.0
        %575 = vmatmul.mubr.f32.gmra.mrb[0].mxu0 %v295
        %v576 = vpop.f32.mrb[0].mxu0
        %v577 = vadd.f32 %v367, %v576
        %v578 = vpop.f32.mrb[0].mxu0
        %v579 = vadd.f32 %v371, %v578
        %580 = vmatprep.mubr.f32.mxu0 0.0
        %581 = vmatmul.mubr.f32.gmra.mrb[0].mxu0 %v296
        %v582 = vpop.f32.mrb[0].mxu0
        %v583 = vadd.f32 %v367, %v582
        %v584 = vpop.f32.mrb[0].mxu0
        %v585 = vadd.f32 %v371, %v584
        %586 = vmatprep.mubr.f32.mxu0 0.0
        %587 = vmatmul.mubr.f32.gmra.mrb[0].mxu0 %v297
        %v588 = vpop.f32.mrb[0].mxu0
        %v589 = vadd.f32 %v367, %v588
        %v590 = vpop.f32.mrb[0].mxu0
        %v591 = vadd.f32 %v371, %v590
        %592 = vdwg.mxu0
        %593 = vmatprep.subr.mxu0 %v301
        %594 = vmatpush1.msra.mxu0 %v300
        %595 = vmatprep.subr.mxu0 %v305
        %596 = vmatpush1.msra.mxu0 %v304
        %597 = vmatprep.subr.mxu0 %v309
        %598 = vmatpush1.msra.mxu0 %v308
        %599 = vmatprep.subr.mxu0 %v313
        %600 = vmatpush1.msra.mxu0 %v312
        %601 = vmatprep.subr.mxu0 %v317
        %602 = vmatpush1.msra.mxu0 %v316
        %603 = vmatprep.subr.mxu0 %v321
        %604 = vmatpush1.msra.mxu0 %v320
        %605 = vmatprep.subr.mxu0 %v325
        %606 = vmatpush1.msra.mxu0 %v324
        %607 = vmatprep.subr.mxu0 %v329
        %608 = vmatpush1.msra.mxu0 %v328
        %609 = vmatprep.subr.mxu0 %v333
        %610 = vmatpush1.msra.mxu0 %v332
        %611 = vmatprep.subr.mxu0 %v337
        %612 = vmatpush1.msra.mxu0 %v336
        %613 = vmatprep.subr.mxu0 %v341
        %614 = vmatpush1.msra.mxu0 %v340
        %615 = vmatprep.subr.mxu0 %v345
        %616 = vmatpush1.msra.mxu0 %v344
        %617 = vmatprep.subr.mxu0 %v349
        %618 = vmatpush1.msra.mxu0 %v348
        %619 = vmatprep.subr.mxu0 %v353
        %620 = vmatpush1.msra.mxu0 %v352
        %621 = vmatprep.subr.mxu0 %v357
        %622 = vmatpush1.msra.mxu0 %v356
        %623 = vmatprep.subr.mxu0 %v361
        %624 = vmatpush1.msra.mxu0 %v360
        %625 = vmatprep.subr.mxu0 0.0
        %626 = vmatpush1.msra.mxu0 0.0
        %627 = vmatprep.subr.mxu0 0.0
        %628 = vmatpush1.msra.mxu0 0.0
        %629 = vmatprep.subr.mxu0 0.0
        %630 = vmatpush1.msra.mxu0 0.0
        %631 = vmatprep.subr.mxu0 0.0
        %632 = vmatpush1.msra.mxu0 0.0
        %633 = vmatprep.subr.mxu0 0.0
        %634 = vmatpush1.msra.mxu0 0.0
        %635 = vmatprep.subr.mxu0 0.0
        %636 = vmatpush1.msra.mxu0 0.0
        %637 = vmatprep.subr.mxu0 0.0
        %638 = vmatpush1.msra.mxu0 0.0
        %639 = vmatprep.subr.mxu0 0.0
        %640 = vmatpush1.msra.mxu0 0.0
        %641 = vmatprep.subr.mxu0 0.0
        %642 = vmatpush1.msra.mxu0 0.0
        %643 = vmatprep.subr.mxu0 0.0
        %644 = vmatpush1.msra.mxu0 0.0
        %645 = vmatprep.subr.mxu0 0.0
        %646 = vmatpush1.msra.mxu0 0.0
        %647 = vmatprep.subr.mxu0 0.0
        %648 = vmatpush1.msra.mxu0 0.0
        %649 = vmatprep.subr.mxu0 0.0
        %650 = vmatpush1.msra.mxu0 0.0
        %651 = vmatprep.subr.mxu0 0.0
        %652 = vmatpush1.msra.mxu0 0.0
        %653 = vmatprep.subr.mxu0 0.0
        %654 = vmatpush1.msra.mxu0 0.0
        %655 = vmatprep.subr.mxu0 0.0
        %656 = vmatpush1.msra.mxu0 0.0
        %657 = vmatprep.mubr.f32.mxu0 0.0
        %658 = vmatmul.mubr.f32.gmra.mrb[0].mxu0 %v274
        %v659 = vpop.f32.mrb[0].mxu0
        %v660 = vadd.f32 %v375, %v659
        %v661 = vpop.f32.mrb[0].mxu0
        %v662 = vadd.f32 %v379, %v661
        %663 = vmatprep.mubr.f32.mxu0 0.0
        %664 = vmatmul.mubr.f32.gmra.mrb[0].mxu0 %v275
        %v665 = vpop.f32.mrb[0].mxu0
        %v666 = vadd.f32 %v375, %v665
        %v667 = vpop.f32.mrb[0].mxu0
        %v668 = vadd.f32 %v379, %v667
        %669 = vmatprep.mubr.f32.mxu0 0.0
        %670 = vmatmul.mubr.f32.gmra.mrb[0].mxu0 %v276
        %v671 = vpop.f32.mrb[0].mxu0
        %v672 = vadd.f32 %v375, %v671
        %v673 = vpop.f32.mrb[0].mxu0
        %v674 = vadd.f32 %v379, %v673
        %675 = vmatprep.mubr.f32.mxu0 0.0
        %676 = vmatmul.mubr.f32.gmra.mrb[0].mxu0 %v277
        %v677 = vpop.f32.mrb[0].mxu0
        %v678 = vadd.f32 %v375, %v677
        %v679 = vpop.f32.mrb[0].mxu0
        %v680 = vadd.f32 %v379, %v679
        %681 = vmatprep.mubr.f32.mxu0 0.0
        %682 = vmatmul.mubr.f32.gmra.mrb[0].mxu0 %v278
        %v683 = vpop.f32.mrb[0].mxu0
        %v684 = vadd.f32 %v375, %v683
        %v685 = vpop.f32.mrb[0].mxu0
        %v686 = vadd.f32 %v379, %v685
        %687 = vmatprep.mubr.f32.mxu0 0.0
        %688 = vmatmul.mubr.f32.gmra.mrb[0].mxu0 %v279
        %v689 = vpop.f32.mrb[0].mxu0
        %v690 = vadd.f32 %v375, %v689
        %v691 = vpop.f32.mrb[0].mxu0
        %v692 = vadd.f32 %v379, %v691
        %693 = vmatprep.mubr.f32.mxu0 0.0
        %694 = vmatmul.mubr.f32.gmra.mrb[0].mxu0 %v280
        %v695 = vpop.f32.mrb[0].mxu0
        %v696 = vadd.f32 %v375, %v695
        %v697 = vpop.f32.mrb[0].mxu0
        %v698 = vadd.f32 %v379, %v697
        %699 = vmatprep.mubr.f32.mxu0 0.0
        %700 = vmatmul.mubr.f32.gmra.mrb[0].mxu0 %v281
        %v701 = vpop.f32.mrb[0].mxu0
        %v702 = vadd.f32 %v375, %v701
        %v703 = vpop.f32.mrb[0].mxu0
        %v704 = vadd.f32 %v379, %v703
        %705 = vmatprep.mubr.f32.mxu0 0.0
        %706 = vmatmul.mubr.f32.gmra.mrb[0].mxu0 %v282
        %v707 = vpop.f32.mrb[0].mxu0
        %v708 = vadd.f32 %v375, %v707
        %v709 = vpop.f32.mrb[0].mxu0
        %v710 = vadd.f32 %v379, %v709
        %711 = vmatprep.mubr.f32.mxu0 0.0
        %712 = vmatmul.mubr.f32.gmra.mrb[0].mxu0 %v283
        %v713 = vpop.f32.mrb[0].mxu0
        %v714 = vadd.f32 %v375, %v713
        %v715 = vpop.f32.mrb[0].mxu0
        %v716 = vadd.f32 %v379, %v715
        %717 = vmatprep.mubr.f32.mxu0 0.0
        %718 = vmatmul.mubr.f32.gmra.mrb[0].mxu0 %v284
        %v719 = vpop.f32.mrb[0].mxu0
        %v720 = vadd.f32 %v375, %v719
        %v721 = vpop.f32.mrb[0].mxu0
        %v722 = vadd.f32 %v379, %v721
        %723 = vmatprep.mubr.f32.mxu0 0.0
        %724 = vmatmul.mubr.f32.gmra.mrb[0].mxu0 %v285
        %v725 = vpop.f32.mrb[0].mxu0
        %v726 = vadd.f32 %v375, %v725
        %v727 = vpop.f32.mrb[0].mxu0
        %v728 = vadd.f32 %v379, %v727
        %729 = vmatprep.mubr.f32.mxu0 0.0
        %730 = vmatmul.mubr.f32.gmra.mrb[0].mxu0 %v286
        %v731 = vpop.f32.mrb[0].mxu0
        %v732 = vadd.f32 %v375, %v731
        %v733 = vpop.f32.mrb[0].mxu0
        %v734 = vadd.f32 %v379, %v733
        %735 = vmatprep.mubr.f32.mxu0 0.0
        %736 = vmatmul.mubr.f32.gmra.mrb[0].mxu0 %v287
        %v737 = vpop.f32.mrb[0].mxu0
        %v738 = vadd.f32 %v375, %v737
        %v739 = vpop.f32.mrb[0].mxu0
        %v740 = vadd.f32 %v379, %v739
        %741 = vmatprep.mubr.f32.mxu0 0.0
        %742 = vmatmul.mubr.f32.gmra.mrb[0].mxu0 %v288
        %v743 = vpop.f32.mrb[0].mxu0
        %v744 = vadd.f32 %v375, %v743
        %v745 = vpop.f32.mrb[0].mxu0
        %v746 = vadd.f32 %v379, %v745
        %747 = vmatprep.mubr.f32.mxu0 0.0
        %748 = vmatmul.mubr.f32.gmra.mrb[0].mxu0 %v289
        %v749 = vpop.f32.mrb[0].mxu0
        %v750 = vadd.f32 %v375, %v749
        %v751 = vpop.f32.mrb[0].mxu0
        %v752 = vadd.f32 %v379, %v751
        %753 = vmatprep.mubr.f32.mxu0 0.0
        %754 = vmatmul.mubr.f32.gmra.mrb[0].mxu0 %v290
        %v755 = vpop.f32.mrb[0].mxu0
        %v756 = vadd.f32 %v375, %v755
        %v757 = vpop.f32.mrb[0].mxu0
        %v758 = vadd.f32 %v379, %v757
        %759 = vmatprep.mubr.f32.mxu0 0.0
        %760 = vmatmul.mubr.f32.gmra.mrb[0].mxu0 %v291
        %v761 = vpop.f32.mrb[0].mxu0
        %v762 = vadd.f32 %v375, %v761
        %v763 = vpop.f32.mrb[0].mxu0
        %v764 = vadd.f32 %v379, %v763
        %765 = vmatprep.mubr.f32.mxu0 0.0
        %766 = vmatmul.mubr.f32.gmra.mrb[0].mxu0 %v292
        %v767 = vpop.f32.mrb[0].mxu0
        %v768 = vadd.f32 %v375, %v767
        %v769 = vpop.f32.mrb[0].mxu0
        %v770 = vadd.f32 %v379, %v769
        %771 = vmatprep.mubr.f32.mxu0 0.0
        %772 = vmatmul.mubr.f32.gmra.mrb[0].mxu0 %v293
        %v773 = vpop.f32.mrb[0].mxu0
        %v774 = vadd.f32 %v375, %v773
        %v775 = vpop.f32.mrb[0].mxu0
        %v776 = vadd.f32 %v379, %v775
        %777 = vmatprep.mubr.f32.mxu0 0.0
        %778 = vmatmul.mubr.f32.gmra.mrb[0].mxu0 %v294
        %v779 = vpop.f32.mrb[0].mxu0
        %v780 = vadd.f32 %v375, %v779
        %v781 = vpop.f32.mrb[0].mxu0
        %v782 = vadd.f32 %v379, %v781
        %783 = vmatprep.mubr.f32.mxu0 0.0
        %784 = vmatmul.mubr.f32.gmra.mrb[0].mxu0 %v295
        %v785 = vpop.f32.mrb[0].mxu0
        %v786 = vadd.f32 %v375, %v785
        %v787 = vpop.f32.mrb[0].mxu0
        %v788 = vadd.f32 %v379, %v787
        %789 = vmatprep.mubr.f32.mxu0 0.0
        %790 = vmatmul.mubr.f32.gmra.mrb[0].mxu0 %v296
        %v791 = vpop.f32.mrb[0].mxu0
        %v792 = vadd.f32 %v375, %v791
        %v793 = vpop.f32.mrb[0].mxu0
        %v794 = vadd.f32 %v379, %v793
        %795 = vmatprep.mubr.f32.mxu0 0.0
        %796 = vmatmul.mubr.f32.gmra.mrb[0].mxu0 %v297
        %v797 = vpop.f32.mrb[0].mxu0
        %v798 = vadd.f32 %v375, %v797
        %v799 = vpop.f32.mrb[0].mxu0
        %v800 = vadd.f32 %v379, %v799
        %801 = vdwg.mxu0
        %v802 = vmul.f32 %v451, 0.5
        %v803 = vmul.f32 %v453, 0.5
        %v804 = vmul.f32 %v660, 0.5
        %v805 = vmul.f32 %v662, 0.5
        %v806 = vmul.f32 %v457, 0.5
        %v807 = vmul.f32 %v459, 0.5
        %v808 = vmul.f32 %v666, 0.5
        %v809 = vmul.f32 %v668, 0.5
        %v810 = vmul.f32 %v463, 0.5
        %v811 = vmul.f32 %v465, 0.5
        %v812 = vmul.f32 %v672, 0.5
        %v813 = vmul.f32 %v674, 0.5
        %v814 = vmul.f32 %v469, 0.5
        %v815 = vmul.f32 %v471, 0.5
        %v816 = vmul.f32 %v678, 0.5
        %v817 = vmul.f32 %v680, 0.5
        %v818 = vmul.f32 %v475, 0.5
        %v819 = vmul.f32 %v477, 0.5
        %v820 = vmul.f32 %v684, 0.5
        %v821 = vmul.f32 %v686, 0.5
        %v822 = vmul.f32 %v481, 0.5
        %v823 = vmul.f32 %v483, 0.5
        %v824 = vmul.f32 %v690, 0.5
        %v825 = vmul.f32 %v692, 0.5
        %v826 = vmul.f32 %v487, 0.5
        %v827 = vmul.f32 %v489, 0.5
        %v828 = vmul.f32 %v696, 0.5
        %v829 = vmul.f32 %v698, 0.5
        %v830 = vmul.f32 %v493, 0.5
        %v831 = vmul.f32 %v495, 0.5
        %v832 = vmul.f32 %v702, 0.5
        %v833 = vmul.f32 %v704, 0.5
        %v834 = vmul.f32 %v499, 0.5
        %v835 = vmul.f32 %v501, 0.5
        %v836 = vmul.f32 %v708, 0.5
        %v837 = vmul.f32 %v710, 0.5
        %v838 = vmul.f32 %v505, 0.5
        %v839 = vmul.f32 %v507, 0.5
        %v840 = vmul.f32 %v714, 0.5
        %v841 = vmul.f32 %v716, 0.5
        %v842 = vmul.f32 %v511, 0.5
        %v843 = vmul.f32 %v513, 0.5
        %v844 = vmul.f32 %v720, 0.5
        %v845 = vmul.f32 %v722, 0.5
        %v846 = vmul.f32 %v517, 0.5
        %v847 = vmul.f32 %v519, 0.5
        %v848 = vmul.f32 %v726, 0.5
        %v849 = vmul.f32 %v728, 0.5
        %v850 = vmul.f32 %v523, 0.5
        %v851 = vmul.f32 %v525, 0.5
        %v852 = vmul.f32 %v732, 0.5
        %v853 = vmul.f32 %v734, 0.5
        %v854 = vmul.f32 %v529, 0.5
        %v855 = vmul.f32 %v531, 0.5
        %v856 = vmul.f32 %v738, 0.5
        %v857 = vmul.f32 %v740, 0.5
        %v858 = vmul.f32 %v535, 0.5
        %v859 = vmul.f32 %v537, 0.5
        %v860 = vmul.f32 %v744, 0.5
        %v861 = vmul.f32 %v746, 0.5
        %v862 = vmul.f32 %v541, 0.5
        %v863 = vmul.f32 %v543, 0.5
        %v864 = vmul.f32 %v750, 0.5
        %v865 = vmul.f32 %v752, 0.5
        %v866 = vmul.f32 %v547, 0.5
        %v867 = vmul.f32 %v549, 0.5
        %v868 = vmul.f32 %v756, 0.5
        %v869 = vmul.f32 %v758, 0.5
        %v870 = vmul.f32 %v553, 0.5
        %v871 = vmul.f32 %v555, 0.5
        %v872 = vmul.f32 %v762, 0.5
        %v873 = vmul.f32 %v764, 0.5
        %v874 = vmul.f32 %v559, 0.5
        %v875 = vmul.f32 %v561, 0.5
        %v876 = vmul.f32 %v768, 0.5
        %v877 = vmul.f32 %v770, 0.5
        %v878 = vmul.f32 %v565, 0.5
        %v879 = vmul.f32 %v567, 0.5
        %v880 = vmul.f32 %v774, 0.5
        %v881 = vmul.f32 %v776, 0.5
        %v882 = vmul.f32 %v571, 0.5
        %v883 = vmul.f32 %v573, 0.5
        %v884 = vmul.f32 %v780, 0.5
        %v885 = vmul.f32 %v782, 0.5
        %v886 = vmul.f32 %v577, 0.5
        %v887 = vmul.f32 %v579, 0.5
        %v888 = vmul.f32 %v786, 0.5
        %v889 = vmul.f32 %v788, 0.5
        %v890 = vmul.f32 %v583, 0.5
        %v891 = vmul.f32 %v585, 0.5
        %v892 = vmul.f32 %v792, 0.5
        %v893 = vmul.f32 %v794, 0.5
        %v894 = vmul.f32 %v589, 0.5
        %v895 = vmul.f32 %v591, 0.5
        %v896 = vmul.f32 %v798, 0.5
        %v897 = vmul.f32 %v800, 0.5
        %v898 = vmul.f32 %v451, 0.70710677
        %v899 = vmul.f32 %v453, 0.70710677
        %v900 = vmul.f32 %v660, 0.70710677
        %v901 = vmul.f32 %v662, 0.70710677
        %v902 = vmul.f32 %v457, 0.70710677
        %v903 = vmul.f32 %v459, 0.70710677
        %v904 = vmul.f32 %v666, 0.70710677
        %v905 = vmul.f32 %v668, 0.70710677
        %v906 = vmul.f32 %v463, 0.70710677
        %v907 = vmul.f32 %v465, 0.70710677
        %v908 = vmul.f32 %v672, 0.70710677
        %v909 = vmul.f32 %v674, 0.70710677
        %v910 = vmul.f32 %v469, 0.70710677
        %v911 = vmul.f32 %v471, 0.70710677
        %v912 = vmul.f32 %v678, 0.70710677
        %v913 = vmul.f32 %v680, 0.70710677
        %v914 = vmul.f32 %v475, 0.70710677
        %v915 = vmul.f32 %v477, 0.70710677
        %v916 = vmul.f32 %v684, 0.70710677
        %v917 = vmul.f32 %v686, 0.70710677
        %v918 = vmul.f32 %v481, 0.70710677
        %v919 = vmul.f32 %v483, 0.70710677
        %v920 = vmul.f32 %v690, 0.70710677
        %v921 = vmul.f32 %v692, 0.70710677
        %v922 = vmul.f32 %v487, 0.70710677
        %v923 = vmul.f32 %v489, 0.70710677
        %v924 = vmul.f32 %v696, 0.70710677
        %v925 = vmul.f32 %v698, 0.70710677
        %v926 = vmul.f32 %v493, 0.70710677
        %v927 = vmul.f32 %v495, 0.70710677
        %v928 = vmul.f32 %v702, 0.70710677
        %v929 = vmul.f32 %v704, 0.70710677
        %v930 = vmul.f32 %v499, 0.70710677
        %v931 = vmul.f32 %v501, 0.70710677
        %v932 = vmul.f32 %v708, 0.70710677
        %v933 = vmul.f32 %v710, 0.70710677
        %v934 = vmul.f32 %v505, 0.70710677
        %v935 = vmul.f32 %v507, 0.70710677
        %v936 = vmul.f32 %v714, 0.70710677
        %v937 = vmul.f32 %v716, 0.70710677
        %v938 = vmul.f32 %v511, 0.70710677
        %v939 = vmul.f32 %v513, 0.70710677
        %v940 = vmul.f32 %v720, 0.70710677
        %v941 = vmul.f32 %v722, 0.70710677
        %v942 = vmul.f32 %v517, 0.70710677
        %v943 = vmul.f32 %v519, 0.70710677
        %v944 = vmul.f32 %v726, 0.70710677
        %v945 = vmul.f32 %v728, 0.70710677
        %v946 = vmul.f32 %v523, 0.70710677
        %v947 = vmul.f32 %v525, 0.70710677
        %v948 = vmul.f32 %v732, 0.70710677
        %v949 = vmul.f32 %v734, 0.70710677
        %v950 = vmul.f32 %v529, 0.70710677
        %v951 = vmul.f32 %v531, 0.70710677
        %v952 = vmul.f32 %v738, 0.70710677
        %v953 = vmul.f32 %v740, 0.70710677
        %v954 = vmul.f32 %v535, 0.70710677
        %v955 = vmul.f32 %v537, 0.70710677
        %v956 = vmul.f32 %v744, 0.70710677
        %v957 = vmul.f32 %v746, 0.70710677
        %v958 = vmul.f32 %v541, 0.70710677
        %v959 = vmul.f32 %v543, 0.70710677
        %v960 = vmul.f32 %v750, 0.70710677
        %v961 = vmul.f32 %v752, 0.70710677
        %v962 = vmul.f32 %v547, 0.70710677
        %v963 = vmul.f32 %v549, 0.70710677
        %v964 = vmul.f32 %v756, 0.70710677
        %v965 = vmul.f32 %v758, 0.70710677
        %v966 = vmul.f32 %v553, 0.70710677
        %v967 = vmul.f32 %v555, 0.70710677
        %v968 = vmul.f32 %v762, 0.70710677
        %v969 = vmul.f32 %v764, 0.70710677
        %v970 = vmul.f32 %v559, 0.70710677
        %v971 = vmul.f32 %v561, 0.70710677
        %v972 = vmul.f32 %v768, 0.70710677
        %v973 = vmul.f32 %v770, 0.70710677
        %v974 = vmul.f32 %v565, 0.70710677
        %v975 = vmul.f32 %v567, 0.70710677
        %v976 = vmul.f32 %v774, 0.70710677
        %v977 = vmul.f32 %v776, 0.70710677
        %v978 = vmul.f32 %v571, 0.70710677
        %v979 = vmul.f32 %v573, 0.70710677
        %v980 = vmul.f32 %v780, 0.70710677
        %v981 = vmul.f32 %v782, 0.70710677
        %v982 = vmul.f32 %v577, 0.70710677
        %v983 = vmul.f32 %v579, 0.70710677
        %v984 = vmul.f32 %v786, 0.70710677
        %v985 = vmul.f32 %v788, 0.70710677
        %v986 = vmul.f32 %v583, 0.70710677
        %v987 = vmul.f32 %v585, 0.70710677
        %v988 = vmul.f32 %v792, 0.70710677
        %v989 = vmul.f32 %v794, 0.70710677
        %v990 = vmul.f32 %v589, 0.70710677
        %v991 = vmul.f32 %v591, 0.70710677
        %v992 = vmul.f32 %v798, 0.70710677
        %v993 = vmul.f32 %v800, 0.70710677
        %v994 = verf.f32.pop %v898
        %v995 = verf.f32.pop %v899
        %v996 = verf.f32.pop %v900
        %v997 = verf.f32.pop %v901
        %v998 = verf.f32.pop %v902
        %v999 = verf.f32.pop %v903
        %v1000 = verf.f32.pop %v904
        %v1001 = verf.f32.pop %v905
        %v1002 = verf.f32.pop %v906
        %v1003 = verf.f32.pop %v907
        %v1004 = verf.f32.pop %v908
        %v1005 = verf.f32.pop %v909
        %v1006 = verf.f32.pop %v910
        %v1007 = verf.f32.pop %v911
        %v1008 = verf.f32.pop %v912
        %v1009 = verf.f32.pop %v913
        %v1010 = verf.f32.pop %v914
        %v1011 = verf.f32.pop %v915
        %v1012 = verf.f32.pop %v916
        %v1013 = verf.f32.pop %v917
        %v1014 = verf.f32.pop %v918
        %v1015 = verf.f32.pop %v919
        %v1016 = verf.f32.pop %v920
        %v1017 = verf.f32.pop %v921
        %v1018 = verf.f32.pop %v922
        %v1019 = verf.f32.pop %v923
        %v1020 = verf.f32.pop %v924
        %v1021 = verf.f32.pop %v925
        %v1022 = verf.f32.pop %v926
        %v1023 = verf.f32.pop %v927
        %v1024 = verf.f32.pop %v928
        %v1025 = verf.f32.pop %v929
        %v1026 = verf.f32.pop %v930
        %v1027 = verf.f32.pop %v931
        %v1028 = verf.f32.pop %v932
        %v1029 = verf.f32.pop %v933
        %v1030 = verf.f32.pop %v934
        %v1031 = verf.f32.pop %v935
        %v1032 = verf.f32.pop %v936
        %v1033 = verf.f32.pop %v937
        %v1034 = verf.f32.pop %v938
        %v1035 = verf.f32.pop %v939
        %v1036 = verf.f32.pop %v940
        %v1037 = verf.f32.pop %v941
        %v1038 = verf.f32.pop %v942
        %v1039 = verf.f32.pop %v943
        %v1040 = verf.f32.pop %v944
        %v1041 = verf.f32.pop %v945
        %v1042 = verf.f32.pop %v946
        %v1043 = verf.f32.pop %v947
        %v1044 = verf.f32.pop %v948
        %v1045 = verf.f32.pop %v949
        %v1046 = verf.f32.pop %v950
        %v1047 = verf.f32.pop %v951
        %v1048 = verf.f32.pop %v952
        %v1049 = verf.f32.pop %v953
        %v1050 = verf.f32.pop %v954
        %v1051 = verf.f32.pop %v955
        %v1052 = verf.f32.pop %v956
        %v1053 = verf.f32.pop %v957
        %v1054 = verf.f32.pop %v958
        %v1055 = verf.f32.pop %v959
        %v1056 = verf.f32.pop %v960
        %v1057 = verf.f32.pop %v961
        %v1058 = verf.f32.pop %v962
        %v1059 = verf.f32.pop %v963
        %v1060 = verf.f32.pop %v964
        %v1061 = verf.f32.pop %v965
        %v1062 = verf.f32.pop %v966
        %v1063 = verf.f32.pop %v967
        %v1064 = verf.f32.pop %v968
        %v1065 = verf.f32.pop %v969
        %v1066 = verf.f32.pop %v970
        %v1067 = verf.f32.pop %v971
        %v1068 = verf.f32.pop %v972
        %v1069 = verf.f32.pop %v973
        %v1070 = verf.f32.pop %v974
        %v1071 = verf.f32.pop %v975
        %v1072 = verf.f32.pop %v976
        %v1073 = verf.f32.pop %v977
        %v1074 = verf.f32.pop %v978
        %v1075 = verf.f32.pop %v979
        %v1076 = verf.f32.pop %v980
        %v1077 = verf.f32.pop %v981
        %v1078 = verf.f32.pop %v982
        %v1079 = verf.f32.pop %v983
        %v1080 = verf.f32.pop %v984
        %v1081 = verf.f32.pop %v985
        %v1082 = verf.f32.pop %v986
        %v1083 = verf.f32.pop %v987
        %v1084 = verf.f32.pop %v988
        %v1085 = verf.f32.pop %v989
        %v1086 = verf.f32.pop %v990
        %v1087 = verf.f32.pop %v991
        %v1088 = verf.f32.pop %v992
        %v1089 = verf.f32.pop %v993
        %v1090 = vadd.f32 %v994, 1.0
        %v1091 = vadd.f32 %v995, 1.0
        %v1092 = vadd.f32 %v996, 1.0
        %v1093 = vadd.f32 %v997, 1.0
        %v1094 = vadd.f32 %v998, 1.0
        %v1095 = vadd.f32 %v999, 1.0
        %v1096 = vadd.f32 %v1000, 1.0
        %v1097 = vadd.f32 %v1001, 1.0
        %v1098 = vadd.f32 %v1002, 1.0
        %v1099 = vadd.f32 %v1003, 1.0
        %v1100 = vadd.f32 %v1004, 1.0
        %v1101 = vadd.f32 %v1005, 1.0
        %v1102 = vadd.f32 %v1006, 1.0
        %v1103 = vadd.f32 %v1007, 1.0
        %v1104 = vadd.f32 %v1008, 1.0
        %v1105 = vadd.f32 %v1009, 1.0
        %v1106 = vadd.f32 %v1010, 1.0
        %v1107 = vadd.f32 %v1011, 1.0
        %v1108 = vadd.f32 %v1012, 1.0
        %v1109 = vadd.f32 %v1013, 1.0
        %v1110 = vadd.f32 %v1014, 1.0
        %v1111 = vadd.f32 %v1015, 1.0
        %v1112 = vadd.f32 %v1016, 1.0
        %v1113 = vadd.f32 %v1017, 1.0
        %v1114 = vadd.f32 %v1018, 1.0
        %v1115 = vadd.f32 %v1019, 1.0
        %v1116 = vadd.f32 %v1020, 1.0
        %v1117 = vadd.f32 %v1021, 1.0
        %v1118 = vadd.f32 %v1022, 1.0
        %v1119 = vadd.f32 %v1023, 1.0
        %v1120 = vadd.f32 %v1024, 1.0
        %v1121 = vadd.f32 %v1025, 1.0
        %v1122 = vadd.f32 %v1026, 1.0
        %v1123 = vadd.f32 %v1027, 1.0
        %v1124 = vadd.f32 %v1028, 1.0
        %v1125 = vadd.f32 %v1029, 1.0
        %v1126 = vadd.f32 %v1030, 1.0
        %v1127 = vadd.f32 %v1031, 1.0
        %v1128 = vadd.f32 %v1032, 1.0
        %v1129 = vadd.f32 %v1033, 1.0
        %v1130 = vadd.f32 %v1034, 1.0
        %v1131 = vadd.f32 %v1035, 1.0
        %v1132 = vadd.f32 %v1036, 1.0
        %v1133 = vadd.f32 %v1037, 1.0
        %v1134 = vadd.f32 %v1038, 1.0
        %v1135 = vadd.f32 %v1039, 1.0
        %v1136 = vadd.f32 %v1040, 1.0
        %v1137 = vadd.f32 %v1041, 1.0
        %v1138 = vadd.f32 %v1042, 1.0
        %v1139 = vadd.f32 %v1043, 1.0
        %v1140 = vadd.f32 %v1044, 1.0
        %v1141 = vadd.f32 %v1045, 1.0
        %v1142 = vadd.f32 %v1046, 1.0
        %v1143 = vadd.f32 %v1047, 1.0
        %v1144 = vadd.f32 %v1048, 1.0
        %v1145 = vadd.f32 %v1049, 1.0
        %v1146 = vadd.f32 %v1050, 1.0
        %v1147 = vadd.f32 %v1051, 1.0
        %v1148 = vadd.f32 %v1052, 1.0
        %v1149 = vadd.f32 %v1053, 1.0
        %v1150 = vadd.f32 %v1054, 1.0
        %v1151 = vadd.f32 %v1055, 1.0
        %v1152 = vadd.f32 %v1056, 1.0
        %v1153 = vadd.f32 %v1057, 1.0
        %v1154 = vadd.f32 %v1058, 1.0
        %v1155 = vadd.f32 %v1059, 1.0
        %v1156 = vadd.f32 %v1060, 1.0
        %v1157 = vadd.f32 %v1061, 1.0
        %v1158 = vadd.f32 %v1062, 1.0
        %v1159 = vadd.f32 %v1063, 1.0
        %v1160 = vadd.f32 %v1064, 1.0
        %v1161 = vadd.f32 %v1065, 1.0
        %v1162 = vadd.f32 %v1066, 1.0
        %v1163 = vadd.f32 %v1067, 1.0
        %v1164 = vadd.f32 %v1068, 1.0
        %v1165 = vadd.f32 %v1069, 1.0
        %v1166 = vadd.f32 %v1070, 1.0
        %v1167 = vadd.f32 %v1071, 1.0
        %v1168 = vadd.f32 %v1072, 1.0
        %v1169 = vadd.f32 %v1073, 1.0
        %v1170 = vadd.f32 %v1074, 1.0
        %v1171 = vadd.f32 %v1075, 1.0
        %v1172 = vadd.f32 %v1076, 1.0
        %v1173 = vadd.f32 %v1077, 1.0
        %v1174 = vadd.f32 %v1078, 1.0
        %v1175 = vadd.f32 %v1079, 1.0
        %v1176 = vadd.f32 %v1080, 1.0
        %v1177 = vadd.f32 %v1081, 1.0
        %v1178 = vadd.f32 %v1082, 1.0
        %v1179 = vadd.f32 %v1083, 1.0
        %v1180 = vadd.f32 %v1084, 1.0
        %v1181 = vadd.f32 %v1085, 1.0
        %v1182 = vadd.f32 %v1086, 1.0
        %v1183 = vadd.f32 %v1087, 1.0
        %v1184 = vadd.f32 %v1088, 1.0
        %v1185 = vadd.f32 %v1089, 1.0
        %v1186 = vmul.f32 %v802, %v1090
        %v1187 = vmul.f32 %v803, %v1091
        %v1188 = vmul.f32 %v804, %v1092
        %v1189 = vmul.f32 %v805, %v1093
        %v1190 = vmul.f32 %v806, %v1094
        %v1191 = vmul.f32 %v807, %v1095
        %v1192 = vmul.f32 %v808, %v1096
        %v1193 = vmul.f32 %v809, %v1097
        %v1194 = vmul.f32 %v810, %v1098
        %v1195 = vmul.f32 %v811, %v1099
        %v1196 = vmul.f32 %v812, %v1100
        %v1197 = vmul.f32 %v813, %v1101
        %v1198 = vmul.f32 %v814, %v1102
        %v1199 = vmul.f32 %v815, %v1103
        %v1200 = vmul.f32 %v816, %v1104
        %v1201 = vmul.f32 %v817, %v1105
        %v1202 = vmul.f32 %v818, %v1106
        %v1203 = vmul.f32 %v819, %v1107
        %v1204 = vmul.f32 %v820, %v1108
        %v1205 = vmul.f32 %v821, %v1109
        %v1206 = vmul.f32 %v822, %v1110
        %v1207 = vmul.f32 %v823, %v1111
        %v1208 = vmul.f32 %v824, %v1112
        %v1209 = vmul.f32 %v825, %v1113
        %v1210 = vmul.f32 %v826, %v1114
        %v1211 = vmul.f32 %v827, %v1115
        %v1212 = vmul.f32 %v828, %v1116
        %v1213 = vmul.f32 %v829, %v1117
        %v1214 = vmul.f32 %v830, %v1118
        %v1215 = vmul.f32 %v831, %v1119
        %v1216 = vmul.f32 %v832, %v1120
        %v1217 = vmul.f32 %v833, %v1121
        %v1218 = vmul.f32 %v834, %v1122
        %v1219 = vmul.f32 %v835, %v1123
        %v1220 = vmul.f32 %v836, %v1124
        %v1221 = vmul.f32 %v837, %v1125
        %v1222 = vmul.f32 %v838, %v1126
        %v1223 = vmul.f32 %v839, %v1127
        %v1224 = vmul.f32 %v840, %v1128
        %v1225 = vmul.f32 %v841, %v1129
        %v1226 = vmul.f32 %v842, %v1130
        %v1227 = vmul.f32 %v843, %v1131
        %v1228 = vmul.f32 %v844, %v1132
        %v1229 = vmul.f32 %v845, %v1133
        %v1230 = vmul.f32 %v846, %v1134
        %v1231 = vmul.f32 %v847, %v1135
        %v1232 = vmul.f32 %v848, %v1136
        %v1233 = vmul.f32 %v849, %v1137
        %v1234 = vmul.f32 %v850, %v1138
        %v1235 = vmul.f32 %v851, %v1139
        %v1236 = vmul.f32 %v852, %v1140
        %v1237 = vmul.f32 %v853, %v1141
        %v1238 = vmul.f32 %v854, %v1142
        %v1239 = vmul.f32 %v855, %v1143
        %v1240 = vmul.f32 %v856, %v1144
        %v1241 = vmul.f32 %v857, %v1145
        %v1242 = vmul.f32 %v858, %v1146
        %v1243 = vmul.f32 %v859, %v1147
        %v1244 = vmul.f32 %v860, %v1148
        %v1245 = vmul.f32 %v861, %v1149
        %v1246 = vmul.f32 %v862, %v1150
        %v1247 = vmul.f32 %v863, %v1151
        %v1248 = vmul.f32 %v864, %v1152
        %v1249 = vmul.f32 %v865, %v1153
        %v1250 = vmul.f32 %v866, %v1154
        %v1251 = vmul.f32 %v867, %v1155
        %v1252 = vmul.f32 %v868, %v1156
        %v1253 = vmul.f32 %v869, %v1157
        %v1254 = vmul.f32 %v870, %v1158
        %v1255 = vmul.f32 %v871, %v1159
        %v1256 = vmul.f32 %v872, %v1160
        %v1257 = vmul.f32 %v873, %v1161
        %v1258 = vmul.f32 %v874, %v1162
        %v1259 = vmul.f32 %v875, %v1163
        %v1260 = vmul.f32 %v876, %v1164
        %v1261 = vmul.f32 %v877, %v1165
        %v1262 = vmul.f32 %v878, %v1166
        %v1263 = vmul.f32 %v879, %v1167
        %v1264 = vmul.f32 %v880, %v1168
        %v1265 = vmul.f32 %v881, %v1169
        %v1266 = vmul.f32 %v882, %v1170
        %v1267 = vmul.f32 %v883, %v1171
        %v1268 = vmul.f32 %v884, %v1172
        %v1269 = vmul.f32 %v885, %v1173
        %v1270 = vmul.f32 %v886, %v1174
        %v1271 = vmul.f32 %v887, %v1175
        %v1272 = vmul.f32 %v888, %v1176
        %v1273 = vmul.f32 %v889, %v1177
        %v1274 = vmul.f32 %v890, %v1178
        %v1275 = vmul.f32 %v891, %v1179
        %v1276 = vmul.f32 %v892, %v1180
        %v1277 = vmul.f32 %v893, %v1181
        %v1278 = vmul.f32 %v894, %v1182
        %v1279 = vmul.f32 %v895, %v1183
        %v1280 = vmul.f32 %v896, %v1184
        %v1281 = vmul.f32 %v897, %v1185
        %v1282 = vld [vmem:[#allocation7] sm:$0xff]
        %v1283 = vld [vmem:[#allocation7 + $0x8] sm:$0xff]
        %v1284 = vld [vmem:[#allocation7 + $0x10] sm:$0xff]
        %v1285 = vld [vmem:[#allocation7 + $0x18] sm:$0xff]
        %v1286 = vld [vmem:[#allocation7 + $0x20] sm:$0xff]
        %v1287 = vld [vmem:[#allocation7 + $0x28] sm:$0xff]
        %v1288 = vld [vmem:[#allocation7 + $0x30] sm:$0xff]
        %v1289 = vld [vmem:[#allocation7 + $0x38] sm:$0xff]
        %v1290 = vld [vmem:[#allocation7 + $0x40] sm:$0xff]
        %v1291 = vld [vmem:[#allocation7 + $0x48] sm:$0xff]
        %v1292 = vld [vmem:[#allocation7 + $0x50] sm:$0xff]
        %v1293 = vld [vmem:[#allocation7 + $0x58] sm:$0xff]
        %v1294 = vld [vmem:[#allocation7 + $0x60] sm:$0xff]
        %v1295 = vld [vmem:[#allocation7 + $0x68] sm:$0xff]
        %v1296 = vld [vmem:[#allocation7 + $0x70] sm:$0xff]
        %v1297 = vld [vmem:[#allocation7 + $0x78] sm:$0xff]
        %v1298 = vld [vmem:[#allocation7 + $0x80] sm:$0xff]
        %v1299 = vld [vmem:[#allocation7 + $0x88] sm:$0xff]
        %v1300 = vld [vmem:[#allocation7 + $0x90] sm:$0xff]
        %v1301 = vld [vmem:[#allocation7 + $0x98] sm:$0xff]
        %v1302 = vld [vmem:[#allocation7 + $0xa0] sm:$0xff]
        %v1303 = vld [vmem:[#allocation7 + $0xa8] sm:$0xff]
        %v1304 = vld [vmem:[#allocation7 + $0xb0] sm:$0xff]
        %v1305 = vld [vmem:[#allocation7 + $0xb8] sm:$0xff]
        %v1306 = vld [vmem:[#allocation7 + $0xc0] sm:$0xff]
        %v1307 = vld [vmem:[#allocation7 + $0xc8] sm:$0xff]
        %v1308 = vld [vmem:[#allocation7 + $0xd0] sm:$0xff]
        %v1309 = vld [vmem:[#allocation7 + $0xd8] sm:$0xff]
        %v1310 = vld [vmem:[#allocation7 + $0xe0] sm:$0xff]
        %v1311 = vld [vmem:[#allocation7 + $0xe8] sm:$0xff]
        %v1312 = vld [vmem:[#allocation7 + $0xf0] sm:$0xff]
        %v1313 = vld [vmem:[#allocation7 + $0xf8] sm:$0xff]
        %v1314 = vld [vmem:[#allocation7 + $0x100] sm:$0xff]
        %v1315 = vld [vmem:[#allocation7 + $0x108] sm:$0xff]
        %v1316 = vld [vmem:[#allocation7 + $0x110] sm:$0xff]
        %v1317 = vld [vmem:[#allocation7 + $0x118] sm:$0xff]
        %v1318 = vld [vmem:[#allocation7 + $0x120] sm:$0xff]
        %v1319 = vld [vmem:[#allocation7 + $0x128] sm:$0xff]
        %v1320 = vld [vmem:[#allocation7 + $0x130] sm:$0xff]
        %v1321 = vld [vmem:[#allocation7 + $0x138] sm:$0xff]
        %v1322 = vld [vmem:[#allocation7 + $0x140] sm:$0xff]
        %v1323 = vld [vmem:[#allocation7 + $0x148] sm:$0xff]
        %v1324 = vld [vmem:[#allocation7 + $0x150] sm:$0xff]
        %v1325 = vld [vmem:[#allocation7 + $0x158] sm:$0xff]
        %v1326 = vld [vmem:[#allocation7 + $0x160] sm:$0xff]
        %v1327 = vld [vmem:[#allocation7 + $0x168] sm:$0xff]
        %v1328 = vld [vmem:[#allocation7 + $0x170] sm:$0xff]
        %v1329 = vld [vmem:[#allocation7 + $0x178] sm:$0xff]
        %v1330 = vld [vmem:[#allocation7 + $0x180] sm:$0xff]
        %v1331 = vld [vmem:[#allocation7 + $0x188] sm:$0xff]
        %v1332 = vld [vmem:[#allocation7 + $0x190] sm:$0xff]
        %v1333 = vld [vmem:[#allocation7 + $0x198] sm:$0xff]
        %v1334 = vld [vmem:[#allocation7 + $0x1a0] sm:$0xff]
        %v1335 = vld [vmem:[#allocation7 + $0x1a8] sm:$0xff]
        %v1336 = vld [vmem:[#allocation7 + $0x1b0] sm:$0xff]
        %v1337 = vld [vmem:[#allocation7 + $0x1b8] sm:$0xff]
        %v1338 = vld [vmem:[#allocation7 + $0x1c0] sm:$0xff]
        %v1339 = vld [vmem:[#allocation7 + $0x1c8] sm:$0xff]
        %v1340 = vld [vmem:[#allocation7 + $0x1d0] sm:$0xff]
        %v1341 = vld [vmem:[#allocation7 + $0x1d8] sm:$0xff]
        %v1342 = vld [vmem:[#allocation7 + $0x1e0] sm:$0xff]
        %v1343 = vld [vmem:[#allocation7 + $0x1e8] sm:$0xff]
        %v1344 = vld [vmem:[#allocation7 + $0x1f0] sm:$0xff]
        %v1345 = vld [vmem:[#allocation7 + $0x1f8] sm:$0xff]
        %v1346 = vld [vmem:[%s4] sm:$0x1]
        %v1348 = vlaneseq
        %v1349 = vshrl.u32 %v1348, 7
        %v1350 = vsub.s32 0, %v1349
        %v1351 = vrot.slane %v1346, %v1350
        %1353 = vmatprep.subr.mxu0 0.0
        %1354 = vmatpush1.msra.mxu0 %v1282
        %1355 = vmatprep.subr.mxu0 0.0
        %1356 = vmatpush1.msra.mxu0 %v1283
        %1357 = vmatprep.subr.mxu0 0.0
        %1358 = vmatpush1.msra.mxu0 %v1284
        %1359 = vmatprep.subr.mxu0 0.0
        %1360 = vmatpush1.msra.mxu0 %v1285
        %1361 = vmatprep.subr.mxu0 0.0
        %1362 = vmatpush1.msra.mxu0 %v1286
        %1363 = vmatprep.subr.mxu0 0.0
        %1364 = vmatpush1.msra.mxu0 %v1287
        %1365 = vmatprep.subr.mxu0 0.0
        %1366 = vmatpush1.msra.mxu0 %v1288
        %1367 = vmatprep.subr.mxu0 0.0
        %1368 = vmatpush1.msra.mxu0 %v1289
        %1369 = vmatprep.subr.mxu0 0.0
        %1370 = vmatpush1.msra.mxu0 %v1290
        %1371 = vmatprep.subr.mxu0 0.0
        %1372 = vmatpush1.msra.mxu0 %v1291
        %1373 = vmatprep.subr.mxu0 0.0
        %1374 = vmatpush1.msra.mxu0 %v1292
        %1375 = vmatprep.subr.mxu0 0.0
        %1376 = vmatpush1.msra.mxu0 %v1293
        %1377 = vmatprep.subr.mxu0 0.0
        %1378 = vmatpush1.msra.mxu0 %v1294
        %1379 = vmatprep.subr.mxu0 0.0
        %1380 = vmatpush1.msra.mxu0 %v1295
        %1381 = vmatprep.subr.mxu0 0.0
        %1382 = vmatpush1.msra.mxu0 %v1296
        %1383 = vmatprep.subr.mxu0 0.0
        %1384 = vmatpush1.msra.mxu0 %v1297
        %1385 = vmatprep.subr.mxu0 0.0
        %1386 = vmatpush1.msra.mxu0 %v1298
        %1387 = vmatprep.subr.mxu0 0.0
        %1388 = vmatpush1.msra.mxu0 %v1299
        %1389 = vmatprep.subr.mxu0 0.0
        %1390 = vmatpush1.msra.mxu0 %v1300
        %1391 = vmatprep.subr.mxu0 0.0
        %1392 = vmatpush1.msra.mxu0 %v1301
        %1393 = vmatprep.subr.mxu0 0.0
        %1394 = vmatpush1.msra.mxu0 %v1302
        %1395 = vmatprep.subr.mxu0 0.0
        %1396 = vmatpush1.msra.mxu0 %v1303
        %1397 = vmatprep.subr.mxu0 0.0
        %1398 = vmatpush1.msra.mxu0 %v1304
        %1399 = vmatprep.subr.mxu0 0.0
        %1400 = vmatpush1.msra.mxu0 %v1305
        %1401 = vmatprep.subr.mxu0 0.0
        %1402 = vmatpush1.msra.mxu0 %v1306
        %1403 = vmatprep.subr.mxu0 0.0
        %1404 = vmatpush1.msra.mxu0 %v1307
        %1405 = vmatprep.subr.mxu0 0.0
        %1406 = vmatpush1.msra.mxu0 %v1308
        %1407 = vmatprep.subr.mxu0 0.0
        %1408 = vmatpush1.msra.mxu0 %v1309
        %1409 = vmatprep.subr.mxu0 0.0
        %1410 = vmatpush1.msra.mxu0 %v1310
        %1411 = vmatprep.subr.mxu0 0.0
        %1412 = vmatpush1.msra.mxu0 %v1311
        %1413 = vmatprep.subr.mxu0 0.0
        %1414 = vmatpush1.msra.mxu0 %v1312
        %1415 = vmatprep.subr.mxu0 0.0
        %1416 = vmatpush1.msra.mxu0 %v1313
        %1417 = vmatprep.mubr.f32.mxu0 %v1187
        %1418 = vmatmul.mubr.f32.gmra.mrb[0].mxu0 %v1186
        %v1419 = vpop.f32.mrb[0].mxu0
        %v1420 = vadd.f32 %v1351, %v1419
        %v1421 = vpop.f32.mrb[0].mxu0
        %1422 = vmatprep.mubr.f32.mxu0 %v1191
        %1423 = vmatmul.mubr.f32.gmra.mrb[0].mxu0 %v1190
        %v1424 = vpop.f32.mrb[0].mxu0
        %v1425 = vadd.f32 %v1351, %v1424
        %v1426 = vpop.f32.mrb[0].mxu0
        %1427 = vmatprep.mubr.f32.mxu0 %v1195
        %1428 = vmatmul.mubr.f32.gmra.mrb[0].mxu0 %v1194
        %v1429 = vpop.f32.mrb[0].mxu0
        %v1430 = vadd.f32 %v1351, %v1429
        %v1431 = vpop.f32.mrb[0].mxu0
        %1432 = vmatprep.mubr.f32.mxu0 %v1199
        %1433 = vmatmul.mubr.f32.gmra.mrb[0].mxu0 %v1198
        %v1434 = vpop.f32.mrb[0].mxu0
        %v1435 = vadd.f32 %v1351, %v1434
        %v1436 = vpop.f32.mrb[0].mxu0
        %1437 = vmatprep.mubr.f32.mxu0 %v1203
        %1438 = vmatmul.mubr.f32.gmra.mrb[0].mxu0 %v1202
        %v1439 = vpop.f32.mrb[0].mxu0
        %v1440 = vadd.f32 %v1351, %v1439
        %v1441 = vpop.f32.mrb[0].mxu0
        %1442 = vmatprep.mubr.f32.mxu0 %v1207
        %1443 = vmatmul.mubr.f32.gmra.mrb[0].mxu0 %v1206
        %v1444 = vpop.f32.mrb[0].mxu0
        %v1445 = vadd.f32 %v1351, %v1444
        %v1446 = vpop.f32.mrb[0].mxu0
        %1447 = vmatprep.mubr.f32.mxu0 %v1211
        %1448 = vmatmul.mubr.f32.gmra.mrb[0].mxu0 %v1210
        %v1449 = vpop.f32.mrb[0].mxu0
        %v1450 = vadd.f32 %v1351, %v1449
        %v1451 = vpop.f32.mrb[0].mxu0
        %1452 = vmatprep.mubr.f32.mxu0 %v1215
        %1453 = vmatmul.mubr.f32.gmra.mrb[0].mxu0 %v1214
        %v1454 = vpop.f32.mrb[0].mxu0
        %v1455 = vadd.f32 %v1351, %v1454
        %v1456 = vpop.f32.mrb[0].mxu0
        %1457 = vmatprep.mubr.f32.mxu0 %v1219
        %1458 = vmatmul.mubr.f32.gmra.mrb[0].mxu0 %v1218
        %v1459 = vpop.f32.mrb[0].mxu0
        %v1460 = vadd.f32 %v1351, %v1459
        %v1461 = vpop.f32.mrb[0].mxu0
        %1462 = vmatprep.mubr.f32.mxu0 %v1223
        %1463 = vmatmul.mubr.f32.gmra.mrb[0].mxu0 %v1222
        %v1464 = vpop.f32.mrb[0].mxu0
        %v1465 = vadd.f32 %v1351, %v1464
        %v1466 = vpop.f32.mrb[0].mxu0
        %1467 = vmatprep.mubr.f32.mxu0 %v1227
        %1468 = vmatmul.mubr.f32.gmra.mrb[0].mxu0 %v1226
        %v1469 = vpop.f32.mrb[0].mxu0
        %v1470 = vadd.f32 %v1351, %v1469
        %v1471 = vpop.f32.mrb[0].mxu0
        %1472 = vmatprep.mubr.f32.mxu0 %v1231
        %1473 = vmatmul.mubr.f32.gmra.mrb[0].mxu0 %v1230
        %v1474 = vpop.f32.mrb[0].mxu0
        %v1475 = vadd.f32 %v1351, %v1474
        %v1476 = vpop.f32.mrb[0].mxu0
        %1477 = vmatprep.mubr.f32.mxu0 %v1235
        %1478 = vmatmul.mubr.f32.gmra.mrb[0].mxu0 %v1234
        %v1479 = vpop.f32.mrb[0].mxu0
        %v1480 = vadd.f32 %v1351, %v1479
        %v1481 = vpop.f32.mrb[0].mxu0
        %1482 = vmatprep.mubr.f32.mxu0 %v1239
        %1483 = vmatmul.mubr.f32.gmra.mrb[0].mxu0 %v1238
        %v1484 = vpop.f32.mrb[0].mxu0
        %v1485 = vadd.f32 %v1351, %v1484
        %v1486 = vpop.f32.mrb[0].mxu0
        %1487 = vmatprep.mubr.f32.mxu0 %v1243
        %1488 = vmatmul.mubr.f32.gmra.mrb[0].mxu0 %v1242
        %v1489 = vpop.f32.mrb[0].mxu0
        %v1490 = vadd.f32 %v1351, %v1489
        %v1491 = vpop.f32.mrb[0].mxu0
        %1492 = vmatprep.mubr.f32.mxu0 %v1247
        %1493 = vmatmul.mubr.f32.gmra.mrb[0].mxu0 %v1246
        %v1494 = vpop.f32.mrb[0].mxu0
        %v1495 = vadd.f32 %v1351, %v1494
        %v1496 = vpop.f32.mrb[0].mxu0
        %1497 = vmatprep.mubr.f32.mxu0 %v1251
        %1498 = vmatmul.mubr.f32.gmra.mrb[0].mxu0 %v1250
        %v1499 = vpop.f32.mrb[0].mxu0
        %v1500 = vadd.f32 %v1351, %v1499
        %v1501 = vpop.f32.mrb[0].mxu0
        %1502 = vmatprep.mubr.f32.mxu0 %v1255
        %1503 = vmatmul.mubr.f32.gmra.mrb[0].mxu0 %v1254
        %v1504 = vpop.f32.mrb[0].mxu0
        %v1505 = vadd.f32 %v1351, %v1504
        %v1506 = vpop.f32.mrb[0].mxu0
        %1507 = vmatprep.mubr.f32.mxu0 %v1259
        %1508 = vmatmul.mubr.f32.gmra.mrb[0].mxu0 %v1258
        %v1509 = vpop.f32.mrb[0].mxu0
        %v1510 = vadd.f32 %v1351, %v1509
        %v1511 = vpop.f32.mrb[0].mxu0
        %1512 = vmatprep.mubr.f32.mxu0 %v1263
        %1513 = vmatmul.mubr.f32.gmra.mrb[0].mxu0 %v1262
        %v1514 = vpop.f32.mrb[0].mxu0
        %v1515 = vadd.f32 %v1351, %v1514
        %v1516 = vpop.f32.mrb[0].mxu0
        %1517 = vmatprep.mubr.f32.mxu0 %v1267
        %1518 = vmatmul.mubr.f32.gmra.mrb[0].mxu0 %v1266
        %v1519 = vpop.f32.mrb[0].mxu0
        %v1520 = vadd.f32 %v1351, %v1519
        %v1521 = vpop.f32.mrb[0].mxu0
        %1522 = vmatprep.mubr.f32.mxu0 %v1271
        %1523 = vmatmul.mubr.f32.gmra.mrb[0].mxu0 %v1270
        %v1524 = vpop.f32.mrb[0].mxu0
        %v1525 = vadd.f32 %v1351, %v1524
        %v1526 = vpop.f32.mrb[0].mxu0
        %1527 = vmatprep.mubr.f32.mxu0 %v1275
        %1528 = vmatmul.mubr.f32.gmra.mrb[0].mxu0 %v1274
        %v1529 = vpop.f32.mrb[0].mxu0
        %v1530 = vadd.f32 %v1351, %v1529
        %v1531 = vpop.f32.mrb[0].mxu0
        %1532 = vmatprep.mubr.f32.mxu0 %v1279
        %1533 = vmatmul.mubr.f32.gmra.mrb[0].mxu0 %v1278
        %v1534 = vpop.f32.mrb[0].mxu0
        %v1535 = vadd.f32 %v1351, %v1534
        %v1536 = vpop.f32.mrb[0].mxu0
        %1537 = vdwg.mxu0
        %1538 = vmatprep.subr.mxu0 0.0
        %1539 = vmatpush1.msra.mxu0 %v1314
        %1540 = vmatprep.subr.mxu0 0.0
        %1541 = vmatpush1.msra.mxu0 %v1315
        %1542 = vmatprep.subr.mxu0 0.0
        %1543 = vmatpush1.msra.mxu0 %v1316
        %1544 = vmatprep.subr.mxu0 0.0
        %1545 = vmatpush1.msra.mxu0 %v1317
        %1546 = vmatprep.subr.mxu0 0.0
        %1547 = vmatpush1.msra.mxu0 %v1318
        %1548 = vmatprep.subr.mxu0 0.0
        %1549 = vmatpush1.msra.mxu0 %v1319
        %1550 = vmatprep.subr.mxu0 0.0
        %1551 = vmatpush1.msra.mxu0 %v1320
        %1552 = vmatprep.subr.mxu0 0.0
        %1553 = vmatpush1.msra.mxu0 %v1321
        %1554 = vmatprep.subr.mxu0 0.0
        %1555 = vmatpush1.msra.mxu0 %v1322
        %1556 = vmatprep.subr.mxu0 0.0
        %1557 = vmatpush1.msra.mxu0 %v1323
        %1558 = vmatprep.subr.mxu0 0.0
        %1559 = vmatpush1.msra.mxu0 %v1324
        %1560 = vmatprep.subr.mxu0 0.0
        %1561 = vmatpush1.msra.mxu0 %v1325
        %1562 = vmatprep.subr.mxu0 0.0
        %1563 = vmatpush1.msra.mxu0 %v1326
        %1564 = vmatprep.subr.mxu0 0.0
        %1565 = vmatpush1.msra.mxu0 %v1327
        %1566 = vmatprep.subr.mxu0 0.0
        %1567 = vmatpush1.msra.mxu0 %v1328
        %1568 = vmatprep.subr.mxu0 0.0
        %1569 = vmatpush1.msra.mxu0 %v1329
        %1570 = vmatprep.subr.mxu0 0.0
        %1571 = vmatpush1.msra.mxu0 %v1330
        %1572 = vmatprep.subr.mxu0 0.0
        %1573 = vmatpush1.msra.mxu0 %v1331
        %1574 = vmatprep.subr.mxu0 0.0
        %1575 = vmatpush1.msra.mxu0 %v1332
        %1576 = vmatprep.subr.mxu0 0.0
        %1577 = vmatpush1.msra.mxu0 %v1333
        %1578 = vmatprep.subr.mxu0 0.0
        %1579 = vmatpush1.msra.mxu0 %v1334
        %1580 = vmatprep.subr.mxu0 0.0
        %1581 = vmatpush1.msra.mxu0 %v1335
        %1582 = vmatprep.subr.mxu0 0.0
        %1583 = vmatpush1.msra.mxu0 %v1336
        %1584 = vmatprep.subr.mxu0 0.0
        %1585 = vmatpush1.msra.mxu0 %v1337
        %1586 = vmatprep.subr.mxu0 0.0
        %1587 = vmatpush1.msra.mxu0 %v1338
        %1588 = vmatprep.subr.mxu0 0.0
        %1589 = vmatpush1.msra.mxu0 %v1339
        %1590 = vmatprep.subr.mxu0 0.0
        %1591 = vmatpush1.msra.mxu0 %v1340
        %1592 = vmatprep.subr.mxu0 0.0
        %1593 = vmatpush1.msra.mxu0 %v1341
        %1594 = vmatprep.subr.mxu0 0.0
        %1595 = vmatpush1.msra.mxu0 %v1342
        %1596 = vmatprep.subr.mxu0 0.0
        %1597 = vmatpush1.msra.mxu0 %v1343
        %1598 = vmatprep.subr.mxu0 0.0
        %1599 = vmatpush1.msra.mxu0 %v1344
        %1600 = vmatprep.subr.mxu0 0.0
        %1601 = vmatpush1.msra.mxu0 %v1345
        %1602 = vmatprep.mubr.f32.mxu0 %v1189
        %1603 = vmatmul.mubr.f32.gmra.mrb[0].mxu0 %v1188
        %v1604 = vpop.f32.mrb[0].mxu0
        %v1605 = vadd.f32 %v1420, %v1604
        %v1606 = vpop.f32.mrb[0].mxu0
        %1607 = vmatprep.mubr.f32.mxu0 %v1193
        %1608 = vmatmul.mubr.f32.gmra.mrb[0].mxu0 %v1192
        %v1609 = vpop.f32.mrb[0].mxu0
        %v1610 = vadd.f32 %v1425, %v1609
        %v1611 = vpop.f32.mrb[0].mxu0
        %1612 = vmatprep.mubr.f32.mxu0 %v1197
        %1613 = vmatmul.mubr.f32.gmra.mrb[0].mxu0 %v1196
        %v1614 = vpop.f32.mrb[0].mxu0
        %v1615 = vadd.f32 %v1430, %v1614
        %v1616 = vpop.f32.mrb[0].mxu0
        %1617 = vmatprep.mubr.f32.mxu0 %v1201
        %1618 = vmatmul.mubr.f32.gmra.mrb[0].mxu0 %v1200
        %v1619 = vpop.f32.mrb[0].mxu0
        %v1620 = vadd.f32 %v1435, %v1619
        %v1621 = vpop.f32.mrb[0].mxu0
        %1622 = vmatprep.mubr.f32.mxu0 %v1205
        %1623 = vmatmul.mubr.f32.gmra.mrb[0].mxu0 %v1204
        %v1624 = vpop.f32.mrb[0].mxu0
        %v1625 = vadd.f32 %v1440, %v1624
        %v1626 = vpop.f32.mrb[0].mxu0
        %1627 = vmatprep.mubr.f32.mxu0 %v1209
        %1628 = vmatmul.mubr.f32.gmra.mrb[0].mxu0 %v1208
        %v1629 = vpop.f32.mrb[0].mxu0
        %v1630 = vadd.f32 %v1445, %v1629
        %v1631 = vpop.f32.mrb[0].mxu0
        %1632 = vmatprep.mubr.f32.mxu0 %v1213
        %1633 = vmatmul.mubr.f32.gmra.mrb[0].mxu0 %v1212
        %v1634 = vpop.f32.mrb[0].mxu0
        %v1635 = vadd.f32 %v1450, %v1634
        %v1636 = vpop.f32.mrb[0].mxu0
        %1637 = vmatprep.mubr.f32.mxu0 %v1217
        %1638 = vmatmul.mubr.f32.gmra.mrb[0].mxu0 %v1216
        %v1639 = vpop.f32.mrb[0].mxu0
        %v1640 = vadd.f32 %v1455, %v1639
        %v1641 = vpop.f32.mrb[0].mxu0
        %1642 = vmatprep.mubr.f32.mxu0 %v1221
        %1643 = vmatmul.mubr.f32.gmra.mrb[0].mxu0 %v1220
        %v1644 = vpop.f32.mrb[0].mxu0
        %v1645 = vadd.f32 %v1460, %v1644
        %v1646 = vpop.f32.mrb[0].mxu0
        %1647 = vmatprep.mubr.f32.mxu0 %v1225
        %1648 = vmatmul.mubr.f32.gmra.mrb[0].mxu0 %v1224
        %v1649 = vpop.f32.mrb[0].mxu0
        %v1650 = vadd.f32 %v1465, %v1649
        %v1651 = vpop.f32.mrb[0].mxu0
        %1652 = vmatprep.mubr.f32.mxu0 %v1229
        %1653 = vmatmul.mubr.f32.gmra.mrb[0].mxu0 %v1228
        %v1654 = vpop.f32.mrb[0].mxu0
        %v1655 = vadd.f32 %v1470, %v1654
        %v1656 = vpop.f32.mrb[0].mxu0
        %1657 = vmatprep.mubr.f32.mxu0 %v1233
        %1658 = vmatmul.mubr.f32.gmra.mrb[0].mxu0 %v1232
        %v1659 = vpop.f32.mrb[0].mxu0
        %v1660 = vadd.f32 %v1475, %v1659
        %v1661 = vpop.f32.mrb[0].mxu0
        %1662 = vmatprep.mubr.f32.mxu0 %v1237
        %1663 = vmatmul.mubr.f32.gmra.mrb[0].mxu0 %v1236
        %v1664 = vpop.f32.mrb[0].mxu0
        %v1665 = vadd.f32 %v1480, %v1664
        %v1666 = vpop.f32.mrb[0].mxu0
        %1667 = vmatprep.mubr.f32.mxu0 %v1241
        %1668 = vmatmul.mubr.f32.gmra.mrb[0].mxu0 %v1240
        %v1669 = vpop.f32.mrb[0].mxu0
        %v1670 = vadd.f32 %v1485, %v1669
        %v1671 = vpop.f32.mrb[0].mxu0
        %1672 = vmatprep.mubr.f32.mxu0 %v1245
        %1673 = vmatmul.mubr.f32.gmra.mrb[0].mxu0 %v1244
        %v1674 = vpop.f32.mrb[0].mxu0
        %v1675 = vadd.f32 %v1490, %v1674
        %v1676 = vpop.f32.mrb[0].mxu0
        %1677 = vmatprep.mubr.f32.mxu0 %v1249
        %1678 = vmatmul.mubr.f32.gmra.mrb[0].mxu0 %v1248
        %v1679 = vpop.f32.mrb[0].mxu0
        %v1680 = vadd.f32 %v1495, %v1679
        %v1681 = vpop.f32.mrb[0].mxu0
        %1682 = vmatprep.mubr.f32.mxu0 %v1253
        %1683 = vmatmul.mubr.f32.gmra.mrb[0].mxu0 %v1252
        %v1684 = vpop.f32.mrb[0].mxu0
        %v1685 = vadd.f32 %v1500, %v1684
        %v1686 = vpop.f32.mrb[0].mxu0
        %1687 = vmatprep.mubr.f32.mxu0 %v1257
        %1688 = vmatmul.mubr.f32.gmra.mrb[0].mxu0 %v1256
        %v1689 = vpop.f32.mrb[0].mxu0
        %v1690 = vadd.f32 %v1505, %v1689
        %v1691 = vpop.f32.mrb[0].mxu0
        %1692 = vmatprep.mubr.f32.mxu0 %v1261
        %1693 = vmatmul.mubr.f32.gmra.mrb[0].mxu0 %v1260
        %v1694 = vpop.f32.mrb[0].mxu0
        %v1695 = vadd.f32 %v1510, %v1694
        %v1696 = vpop.f32.mrb[0].mxu0
        %1697 = vmatprep.mubr.f32.mxu0 %v1265
        %1698 = vmatmul.mubr.f32.gmra.mrb[0].mxu0 %v1264
        %v1699 = vpop.f32.mrb[0].mxu0
        %v1700 = vadd.f32 %v1515, %v1699
        %v1701 = vpop.f32.mrb[0].mxu0
        %1702 = vmatprep.mubr.f32.mxu0 %v1269
        %1703 = vmatmul.mubr.f32.gmra.mrb[0].mxu0 %v1268
        %v1704 = vpop.f32.mrb[0].mxu0
        %v1705 = vadd.f32 %v1520, %v1704
        %v1706 = vpop.f32.mrb[0].mxu0
        %1707 = vmatprep.mubr.f32.mxu0 %v1273
        %1708 = vmatmul.mubr.f32.gmra.mrb[0].mxu0 %v1272
        %v1709 = vpop.f32.mrb[0].mxu0
        %v1710 = vadd.f32 %v1525, %v1709
        %v1711 = vpop.f32.mrb[0].mxu0
        %1712 = vmatprep.mubr.f32.mxu0 %v1277
        %1713 = vmatmul.mubr.f32.gmra.mrb[0].mxu0 %v1276
        %v1714 = vpop.f32.mrb[0].mxu0
        %v1715 = vadd.f32 %v1530, %v1714
        %v1716 = vpop.f32.mrb[0].mxu0
        %1717 = vmatprep.mubr.f32.mxu0 %v1281
        %1718 = vmatmul.mubr.f32.gmra.mrb[0].mxu0 %v1280
        %v1719 = vpop.f32.mrb[0].mxu0
        %v1720 = vadd.f32 %v1535, %v1719
        %v1721 = vpop.f32.mrb[0].mxu0
        %1722 = vdwg.mxu0
        %1723 = vst [vmem:[%s271] sm:$0xff] %v1605
        %1724 = vst [vmem:[%s271 + $0x8] sm:$0xff] %v1610
        %1725 = vst [vmem:[%s271 + $0x10] sm:$0xff] %v1615
        %1726 = vst [vmem:[%s271 + $0x18] sm:$0xff] %v1620
        %1727 = vst [vmem:[%s271 + $0x20] sm:$0xff] %v1625
        %1728 = vst [vmem:[%s271 + $0x28] sm:$0xff] %v1630
        %1729 = vst [vmem:[%s271 + $0x30] sm:$0xff] %v1635
        %1730 = vst [vmem:[%s271 + $0x38] sm:$0xff] %v1640
        %1731 = vst [vmem:[%s271 + $0x40] sm:$0xff] %v1645
        %1732 = vst [vmem:[%s271 + $0x48] sm:$0xff] %v1650
        %1733 = vst [vmem:[%s271 + $0x50] sm:$0xff] %v1655
        %1734 = vst [vmem:[%s271 + $0x58] sm:$0xff] %v1660
        %1735 = vst [vmem:[%s271 + $0x60] sm:$0xff] %v1665
        %1736 = vst [vmem:[%s271 + $0x68] sm:$0xff] %v1670
        %1737 = vst [vmem:[%s271 + $0x70] sm:$0xff] %v1675
        %1738 = vst [vmem:[%s271 + $0x78] sm:$0xff] %v1680
        %1739 = vst [vmem:[%s271 + $0x80] sm:$0xff] %v1685
        %1740 = vst [vmem:[%s271 + $0x88] sm:$0xff] %v1690
        %1741 = vst [vmem:[%s271 + $0x90] sm:$0xff] %v1695
        %1742 = vst [vmem:[%s271 + $0x98] sm:$0xff] %v1700
        %1743 = vst [vmem:[%s271 + $0xa0] sm:$0xff] %v1705
        %1744 = vst [vmem:[%s271 + $0xa8] sm:$0xff] %v1710
        %1745 = vst [vmem:[%s271 + $0xb0] sm:$0xff] %v1715
        %1746 = vst [vmem:[%s271 + $0xb8] sm:$0xff] %v1720
        %s1747 = sand.u32 %s141, 1
        %s1748 = scalar_lea.sflag [#allocation4], %s1747
        %s1749 = sand.u32 %s141, 1
        %s1750 = smul.addr %s1749, 192
        %s1751 = scalar_lea.vmem [#allocation8], %s1750
        // Predicated region
        $region53: #{feed_forward_network.1} parent=39 // pred_check
          %p1752 = pneg %p151
        $region54: #{feed_forward_network.1} parent=39 // pred_check_branch
          %1754 = sbr.rel (%p1752) target = $region56
        $region55: #{feed_forward_network.1} parent=39 // pred_region
          %s1755 = smul.u32 24, %s23
          %s1757 = ssub.s32 3072, 3072
          %1758 = vsyncadd %s1748, %s1757
          %s1759 = smul.addr %s1755, 128
          %s1760 = scalar_lea.hbm %s5, %s1759
          %s1761 = sshll.u32 %s1751, 4
          %s1762 = int_to_ptr.vmem [resolvable:$true] %s1761
          %1767 = dma.vmem_to_hbm [thread:$0]  %s1762, 3072, %s1760, %s1748, 128, 128, 8
        $region56: #{feed_forward_network.1} parent=39 // pred_fallthru
          _
      $region40: #{feed_forward_network.1} parent=5 // pred_fallthru
        _
      %p1768 = scmp.le.s32.totalorder 2, %s18
      // Predicated region
      $region57: #{feed_forward_network.1} parent=5 // pred_check
        %p1769 = pneg %p1768
      $region58: #{feed_forward_network.1} parent=5 // pred_check_branch
        %1771 = sbr.rel (%p1769) target = $region60
      $region59: #{feed_forward_network.1} parent=5 // pred_region
        %s1772 = ssub.s32 %s18, 2
        // Predicated region
        $region61: #{feed_forward_network.1} parent=59 // pred_check
          %p1773 = pneg %p157
        $region62: #{feed_forward_network.1} parent=59 // pred_check_branch
          %1775 = sbr.rel (%p1773) target = $region64
        $region63: #{feed_forward_network.1} parent=59 // pred_region
          %s1776 = sand.u32 %s142, 1
          %s1777 = scalar_lea.sflag [#allocation4], %s1776
          %s1778 = sand.u32 %s142, 1
          %s1779 = smul.addr %s1778, 192
          %s1780 = scalar_lea.vmem [#allocation8], %s1779
          %1781 = dma.done %s1777, 3072
        $region64: #{feed_forward_network.1} parent=59 // pred_fallthru
          _
      $region60: #{feed_forward_network.1} parent=5 // pred_fallthru
        _
    $region6: #{feed_forward_network.1} parent=1 // loop_footer
      %s22 = sadd.s32 1, %s18
    $region7: #{feed_forward_network.1} parent=1 // loop_footer_branch
      %17 = sbr.rel target = $region3
    $region8: #{feed_forward_network.1} parent=1 // loop_exit
      _
    %1782 = vsyncpa [#allocation3], 1
    %s1783 = scalar_lea.sflag [#allocation3], 1
    %1784 = vsyncpa %s1783, 1
    %1785 = vsyncpa [#allocation6], 1
    %1786 = vsyncpa [#allocation4], 1
    %s1787 = scalar_lea.sflag [#allocation4], 1
    %1788 = vsyncpa %s1787, 1

</llo_original>
